<compile_context>
chip_gen: v5e
topology: v5e:2x2
jax: 0.10.0
libtpu: 0.0.40
codegen_flags: <defaults>
</compile_context>

<pallas_src>
import math

import jax
import jax.numpy as jnp
from jax.experimental import pallas as pl
from jax.experimental.pallas import tpu as pltpu


# ------------------------------ fused kernel -------------------------------

def convnet1d_kernel(p1_ref, w1_ref, b1_ref, w2_ref, b2_ref,
                     g1_ref, fb1_ref, fw2_ref, fb2_ref, o_ref):
    """Full ConvNet1D forward for one batch tile, fully VMEM-resident.

    Row layout everywhere: row = q*TB + b  (q = pooled position, b = batch).
    """
    f32 = jnp.float32
    TB = o_ref.shape[0]                 # batch tile size
    R = p1_ref.shape[0]                 # 25 * TB rows
    NP = R // TB                        # 25 pooled positions

    # ---- conv1 (1->32, k=3, pad=1) + ReLU + MaxPool1d(2) -------------------
    # p1 columns: [x[4q-1], x[4q], x[4q+1], x[4q+2], x[4q+3], x[4q+4]]
    # w1: (6,128) shifted-block weight, phase a lives in rows a:a+3 / cols 32a:32a+32.
    pre1 = jnp.dot(p1_ref[...], w1_ref[...], preferred_element_type=f32)   # (R,128)
    b1 = b1_ref[...]                                                       # (1,32)
    # pool: h1[2q]   = relu(max(conv(4q),   conv(4q+1)) + b1)
    #       h1[2q+1] = relu(max(conv(4q+2), conv(4q+3)) + b1)
    h1e = jnp.maximum(jnp.maximum(pre1[:, 0:32], pre1[:, 32:64]) + b1, 0.0)
    h1o = jnp.maximum(jnp.maximum(pre1[:, 64:96], pre1[:, 96:128]) + b1, 0.0)

    # ---- conv2 (32->64, k=3, pad=1) + ReLU + MaxPool1d(2) ------------------
    # Shared 128-lane patch: [h1[2q-1] | h1[2q] | h1[2q+1] | h1[2q+2]].
    # Parity 0 (pos 2q)   reads cols   0:96, parity 1 (pos 2q+1) reads cols 32:128,
    # encoded in the (128,128) shift-by-32 block weight.
    zr = jnp.zeros((TB, 32), f32)
    h1o_m1 = jnp.concatenate([zr, h1o[:-TB]], axis=0)        # h1[2q-1] (0 at q=0)
    h1e_p1 = jnp.concatenate([h1e[TB:], zr], axis=0)         # h1[2q+2] (0 at q=24)
    p2 = jnp.concatenate([h1o_m1, h1e, h1o, h1e_p1], axis=1)               # (R,128)
    pre2 = jnp.dot(p2, w2_ref[...], preferred_element_type=f32)            # (R,128)
    h2 = jnp.maximum(
        jnp.maximum(pre2[:, 0:64], pre2[:, 64:128]) + b2_ref[...], 0.0)    # (R,64)

    # ---- flatten (folded into fc1 weight packing) + fc1 + ReLU -------------
    # 7 grouped K=256 dots instead of 25 K=64 dots; the last (ragged) group
    # re-reads positions 21..24 but its weight is zero for 21..23.
    NG = g1_ref.shape[0]                                     # 7
    acc = jnp.zeros((TB, 128), f32)
    for g in range(NG):
        start = 4 * g if 4 * g + 4 <= NP else NP - 4
        patch = jnp.concatenate(
            [h2[(start + t) * TB:(start + t + 1) * TB, :] for t in range(4)],
            axis=1)                                          # (TB, 256)
        acc = acc + jnp.dot(patch, g1_ref[g], preferred_element_type=f32)
    hidden = jnp.maximum(acc + fb1_ref[...], 0.0)            # (TB,128); cols 120: == 0

    # ---- fc2 (lane-dense 128-wide output; cols 15: are exactly zero) -------
    out = jnp.dot(hidden, fw2_ref[...], preferred_element_type=f32) + fb2_ref[...]
    o_ref[...] = out.astype(o_ref.dtype)


# ------------------------------- wrapper ------------------------------------

def _pick_tile():
    """Per-generation batch tile + VMEM limit (conservative for v7x/unknown)."""
    try:
        kind = jax.devices()[0].device_kind.lower()
    except Exception:
        kind = ""
    if ("v5" in kind) or ("v6" in kind):
        return 256, 64 * 1024 * 1024      # 128 MiB physical VMEM: larger tile
    return 128, 32 * 1024 * 1024           # v7x (64 MiB VMEM) / unknown


def convnet1d_forward(x, kp):
    """x: (B, 100) float32 -> (B, 15) float32, one fused pallas_call."""
    w1_big, b1k, w2_big, b2k, g1g, fb1, fw2, fb2 = kp
    B, L = x.shape
    assert L == 100, "fc1 expects 64 * 25 features -> input length must be 100"

    max_tb, vmem_limit = _pick_tile()
    if B <= max_tb:
        TB, Bp = B, B
    else:
        TB = max_tb
        Bp = pl.cdiv(B, TB) * TB
    nb = Bp // TB
    xp = x if Bp == B else jnp.pad(x, ((0, Bp - B), (0, 0)))

    # Host-side im2col for conv1 (input is only ~400 B/sample): build the
    # 6-column shared patch so the kernel does zero conv1 shuffling.
    x4 = xp.reshape(Bp, 25, 4)                               # x4[b,q,ph] = x[b,4q+ph]
    zc = jnp.zeros((Bp, 1), jnp.float32)
    xm1 = jnp.concatenate([zc, x4[:, :-1, 3]], axis=1)       # x[4q-1] (0 at q=0)
    xp4 = jnp.concatenate([x4[:, 1:, 0], zc], axis=1)        # x[4q+4] (0 at q=24)
    p1 = jnp.concatenate([xm1[..., None], x4, xp4[..., None]], axis=-1)   # (Bp,25,6)
    x_rows = (p1.reshape(nb, TB, 25, 6)
                .transpose(0, 2, 1, 3)
                .reshape(nb * 25 * TB, 6))                   # row = q*TB + b

    R_blk = 25 * TB
    flops = int(2 * 25 * Bp * (6 * 128 + 128 * 128)          # conv1 + conv2 GEMMs
                + 2 * Bp * (7 * 256 * 128 + 128 * 128))      # fc1 + fc2 GEMMs
    bytes_accessed = int(4 * (x_rows.size + Bp * 128
                              + sum(int(a.size) for a in kp)))

    out = pl.pallas_call(
        convnet1d_kernel,
        out_shape=jax.ShapeDtypeStruct((Bp, 128), jnp.float32),
        grid=(nb,),
        in_specs=[
            pl.BlockSpec((R_blk, 6), lambda i: (i, 0)),          # conv1 patch rows
            pl.BlockSpec((6, 128), lambda i: (0, 0)),            # conv1 block weight
            pl.BlockSpec((1, 32), lambda i: (0, 0)),             # conv1 bias
            pl.BlockSpec((128, 128), lambda i: (0, 0)),          # conv2 block weight
            pl.BlockSpec((1, 64), lambda i: (0, 0)),             # conv2 bias
            pl.BlockSpec((7, 256, 128), lambda i: (0, 0, 0)),    # fc1 grouped weight
            pl.BlockSpec((1, 128), lambda i: (0, 0)),            # fc1 bias (padded)
            pl.BlockSpec((128, 128), lambda i: (0, 0)),          # fc2 weight (padded)
            pl.BlockSpec((1, 128), lambda i: (0, 0)),            # fc2 bias (padded)
        ],
        out_specs=pl.BlockSpec((TB, 128), lambda i: (i, 0)),
        compiler_params=pltpu.CompilerParams(
            dimension_semantics=("parallel",),
            vmem_limit_bytes=vmem_limit),
        cost_estimate=pl.CostEstimate(
            flops=flops, transcendentals=0, bytes_accessed=bytes_accessed),
    )(x_rows, w1_big, b1k, w2_big, b2k, g1g, fb1, fw2, fb2)

    out = out[:, :15]
    return out if Bp == B else out[:B]


# -------------------- deterministic parameter creation ----------------------

def init_torch_params(key):
    """PyTorch-shaped parameters, deterministic (uniform +/- 1/sqrt(fan_in))."""
    ks = jax.random.split(key, 8)

    def u(k, shape, fan_in):
        s = 1.0 / math.sqrt(fan_in)
        return jax.random.uniform(k, shape, jnp.float32, -s, s)

    W1 = u(ks[0], (32, 1, 3), 1 * 3)
    b1 = u(ks[1], (32,), 1 * 3)
    W2 = u(ks[2], (64, 32, 3), 32 * 3)
    b2 = u(ks[3], (64,), 32 * 3)
    FW1 = u(ks[4], (120, 64 * 25), 64 * 25)
    Fb1 = u(ks[5], (120,), 64 * 25)
    FW2 = u(ks[6], (15, 120), 120)
    Fb2 = u(ks[7], (15,), 120)
    return (W1, b1, W2, b2, FW1, Fb1, FW2, Fb2)


def pack_params_for_kernels(tp):
    """PyTorch-layout weights -> lane-dense fused-kernel layouts."""
    W1, b1, W2, b2, FW1, Fb1, FW2, Fb2 = tp

    # conv1: (6, 128) shifted-block weight over the shared 6-column patch.
    # Phase a (conv position 4q+a) uses patch cols a..a+2 -> rows a:a+3.
    w1c = jnp.transpose(W1[:, 0, :])                         # (3,32)  [tap, out_ch]
    w1_big = jnp.zeros((6, 128), jnp.float32)
    for a in range(4):
        w1_big = w1_big.at[a:a + 3, 32 * a:32 * a + 32].set(w1c)
    b1k = b1.reshape(1, 32)

    # conv2: (128, 128) shift-by-32 block weight over the shared 128-lane patch.
    w2c = jnp.transpose(W2, (2, 1, 0)).reshape(96, 64)       # row = 32*tap + in_ch
    w2_big = jnp.zeros((128, 128), jnp.float32)
    w2_big = w2_big.at[0:96, 0:64].set(w2c)        # parity 0: patch cols 0:96
    w2_big = w2_big.at[32:128, 64:128].set(w2c)    # parity 1: patch cols 32:128
    b2k = b2.reshape(1, 64)

    # fc1: fold PyTorch (B,C,L)-order flatten into the weight, pad 120 -> 128,
    # then group 4 positions per K=256 dot (7 groups; ragged tail deduplicated).
    g1 = jnp.transpose(FW1.reshape(120, 64, 25), (2, 1, 0))  # (25,64,120): [p,c,j]
    g1 = jnp.pad(g1, ((0, 0), (0, 0), (0, 8)))               # (25,64,128)
    NP, NG = 25, 7
    g1g = jnp.zeros((NG, 256, 128), jnp.float32)
    covered = set()
    for g in range(NG):
        start = 4 * g if 4 * g + 4 <= NP else NP - 4
        for t in range(4):
            p = start + t
            if p in covered:
                continue
            covered.add(p)
            g1g = g1g.at[g, 64 * t:64 * t + 64, :].set(g1[p])
    fb1 = jnp.pad(Fb1, (0, 8)).reshape(1, 128)

    # fc2: pad to (128, 128) so the output store is lane-dense.
    fw2 = jnp.zeros((128, 128), jnp.float32)
    fw2 = fw2.at[0:120, 0:15].set(jnp.transpose(FW2))
    fb2 = jnp.zeros((1, 128), jnp.float32).at[0, 0:15].set(Fb2)
    return (w1_big, b1k, w2_big, b2k, g1g, fb1, fw2, fb2)


# ---------------------- pure-JAX reference (for check) ----------------------

def reference_forward(x, tp):
    W1, b1, W2, b2, FW1, Fb1, FW2, Fb2 = tp
    dn = ("NCH", "OIH", "NCH")
    h = jax.lax.conv_general_dilated(x[:, None, :], W1, (1,), ((1, 1),),
                                     dimension_numbers=dn)
    h = jnp.maximum(h + b1[None, :, None], 0.0)
    h = jax.lax.reduce_window(h, -jnp.inf, jax.lax.max, (1, 1, 2), (1, 1, 2), "VALID")
    h = jax.lax.conv_general_dilated(h, W2, (1,), ((1, 1),),
                                     dimension_numbers=dn)
    h = jnp.maximum(h + b2[None, :, None], 0.0)
    h = jax.lax.reduce_window(h, -jnp.inf, jax.lax.max, (1, 1, 2), (1, 1, 2), "VALID")
    h = h.reshape(h.shape[0], -1)                            # (B, 64*25), PyTorch order
    h = jnp.maximum(h @ FW1.T + Fb1, 0.0)
    return h @ FW2.T + Fb2


# --------------------------------- main --------------------------------------

if __name__ == "__main__":
    key = jax.random.PRNGKey(0)
    pkey, xkey = jax.random.split(key)

    torch_params = init_torch_params(pkey)
    kparams = pack_params_for_kernels(torch_params)

    B, L = 2, 100   # fc1 expects 64*25 features -> input sequence length 100
    x = jax.random.normal(xkey, (B, L), jnp.float32)

    out = jax.jit(convnet1d_forward)(x, kparams)
    out = jax.block_until_ready(out)
    assert out.shape == (B, 15) and out.dtype == jnp.float32

    ref = reference_forward(x, torch_params)
    err = float(jnp.max(jnp.abs(out - ref)))
    assert jnp.allclose(out, ref, atol=1e-3, rtol=1e-3), (
        "mismatch vs reference, max abs diff = %e" % err)

    print("KERNEL_OK")
</pallas_src>

<mosaic_0001>
module attributes {stable_mosaic.version = 11 : i64} {
  func.func @convnet1d_kernel(%arg0: i32, %arg1: memref<50x6xf32, #tpu.memory_space<vmem>>, %arg2: memref<6x128xf32, #tpu.memory_space<vmem>>, %arg3: memref<1x32xf32, #tpu.memory_space<vmem>>, %arg4: memref<128x128xf32, #tpu.memory_space<vmem>>, %arg5: memref<1x64xf32, #tpu.memory_space<vmem>>, %arg6: memref<7x256x128xf32, #tpu.memory_space<vmem>>, %arg7: memref<1x128xf32, #tpu.memory_space<vmem>>, %arg8: memref<128x128xf32, #tpu.memory_space<vmem>>, %arg9: memref<1x128xf32, #tpu.memory_space<vmem>>, %arg10: memref<2x128xf32, #tpu.memory_space<vmem>>) attributes {dimension_semantics = [#tpu.dimension_semantics<parallel>], iteration_bounds = array<i64: 1>, scalar_prefetch = 0 : i64, scratch_operands = 0 : i64, tpu.core_type = #tpu.core_type<tc>, window_params = [{transform_indices = @transform_0, window_bounds = array<i64: 50, 6>}, {pipeline_mode = #tpu.pipeline_mode<synchronous>, transform_indices = @transform_1, window_bounds = array<i64: 6, 128>}, {pipeline_mode = #tpu.pipeline_mode<synchronous>, transform_indices = @transform_2, window_bounds = array<i64: 1, 32>}, {pipeline_mode = #tpu.pipeline_mode<synchronous>, transform_indices = @transform_3, window_bounds = array<i64: 128, 128>}, {pipeline_mode = #tpu.pipeline_mode<synchronous>, transform_indices = @transform_4, window_bounds = array<i64: 1, 64>}, {pipeline_mode = #tpu.pipeline_mode<synchronous>, transform_indices = @transform_5, window_bounds = array<i64: 7, 256, 128>}, {pipeline_mode = #tpu.pipeline_mode<synchronous>, transform_indices = @transform_6, window_bounds = array<i64: 1, 128>}, {pipeline_mode = #tpu.pipeline_mode<synchronous>, transform_indices = @transform_7, window_bounds = array<i64: 128, 128>}, {pipeline_mode = #tpu.pipeline_mode<synchronous>, transform_indices = @transform_8, window_bounds = array<i64: 1, 128>}, {transform_indices = @transform_9, window_bounds = array<i64: 2, 128>}]} {
    %c0 = arith.constant 0 : index
    %c0_0 = arith.constant 0 : index
    %0 = vector.load %arg1[%c0, %c0_0] : memref<50x6xf32, #tpu.memory_space<vmem>>, vector<50x6xf32>
    %c0_1 = arith.constant 0 : index
    %c0_2 = arith.constant 0 : index
    %1 = vector.load %arg2[%c0_1, %c0_2] : memref<6x128xf32, #tpu.memory_space<vmem>>, vector<6x128xf32>
    %cst = arith.constant dense<0.000000e+00> : vector<50x128xf32>
    %2 = tpu.matmul %0, %1, %cst {dimension_numbers = #tpu.dot_dimension_numbers<[1], [0], [0], [1], [0, 0, 1, 1], [], []>} : vector<50x6xf32>, vector<6x128xf32>, vector<50x128xf32> -> vector<50x128xf32>
    %c0_3 = arith.constant 0 : index
    %c0_4 = arith.constant 0 : index
    %3 = vector.load %arg3[%c0_3, %c0_4] : memref<1x32xf32, #tpu.memory_space<vmem>>, vector<1x32xf32>
    %4 = vector.extract_strided_slice %2 {offsets = [0, 0], sizes = [50, 32], strides = [1, 1]} : vector<50x128xf32> to vector<50x32xf32>
    %5 = vector.extract_strided_slice %2 {offsets = [0, 32], sizes = [50, 32], strides = [1, 1]} : vector<50x128xf32> to vector<50x32xf32>
    %6 = arith.maximumf %4, %5 : vector<50x32xf32>
    %7 = vector.broadcast %3 : vector<1x32xf32> to vector<50x32xf32>
    %8 = arith.addf %6, %7 : vector<50x32xf32>
    %cst_5 = arith.constant 0.000000e+00 : f32
    %9 = vector.broadcast %cst_5 : f32 to vector<50x32xf32>
    %10 = arith.maximumf %8, %9 : vector<50x32xf32>
    %11 = vector.extract_strided_slice %2 {offsets = [0, 64], sizes = [50, 32], strides = [1, 1]} : vector<50x128xf32> to vector<50x32xf32>
    %12 = vector.extract_strided_slice %2 {offsets = [0, 96], sizes = [50, 32], strides = [1, 1]} : vector<50x128xf32> to vector<50x32xf32>
    %13 = arith.maximumf %11, %12 : vector<50x32xf32>
    %14 = vector.broadcast %3 : vector<1x32xf32> to vector<50x32xf32>
    %15 = arith.addf %13, %14 : vector<50x32xf32>
    %cst_6 = arith.constant 0.000000e+00 : f32
    %16 = vector.broadcast %cst_6 : f32 to vector<50x32xf32>
    %17 = arith.maximumf %15, %16 : vector<50x32xf32>
    %cst_7 = arith.constant 0.000000e+00 : f32
    %18 = vector.broadcast %cst_7 : f32 to vector<2x32xf32>
    %19 = vector.extract_strided_slice %17 {offsets = [0, 0], sizes = [48, 32], strides = [1, 1]} : vector<50x32xf32> to vector<48x32xf32>
    %20 = tpu.concatenate %18, %19 in 0 : vector<2x32xf32>, vector<48x32xf32> -> vector<50x32xf32>
    %21 = vector.extract_strided_slice %10 {offsets = [2, 0], sizes = [48, 32], strides = [1, 1]} : vector<50x32xf32> to vector<48x32xf32>
    %22 = tpu.concatenate %21, %18 in 0 : vector<48x32xf32>, vector<2x32xf32> -> vector<50x32xf32>
    %23 = tpu.concatenate %20, %10, %17, %22 in 1 : vector<50x32xf32>, vector<50x32xf32>, vector<50x32xf32>, vector<50x32xf32> -> vector<50x128xf32>
    %c0_8 = arith.constant 0 : index
    %c0_9 = arith.constant 0 : index
    %24 = vector.load %arg4[%c0_8, %c0_9] : memref<128x128xf32, #tpu.memory_space<vmem>>, vector<128x128xf32>
    %cst_10 = arith.constant dense<0.000000e+00> : vector<50x128xf32>
    %25 = tpu.matmul %23, %24, %cst_10 {dimension_numbers = #tpu.dot_dimension_numbers<[1], [0], [0], [1], [0, 0, 1, 1], [], []>} : vector<50x128xf32>, vector<128x128xf32>, vector<50x128xf32> -> vector<50x128xf32>
    %26 = vector.extract_strided_slice %25 {offsets = [0, 0], sizes = [50, 64], strides = [1, 1]} : vector<50x128xf32> to vector<50x64xf32>
    %27 = vector.extract_strided_slice %25 {offsets = [0, 64], sizes = [50, 64], strides = [1, 1]} : vector<50x128xf32> to vector<50x64xf32>
    %28 = arith.maximumf %26, %27 : vector<50x64xf32>
    %c0_11 = arith.constant 0 : index
    %c0_12 = arith.constant 0 : index
    %29 = vector.load %arg5[%c0_11, %c0_12] : memref<1x64xf32, #tpu.memory_space<vmem>>, vector<1x64xf32>
    %30 = vector.broadcast %29 : vector<1x64xf32> to vector<50x64xf32>
    %31 = arith.addf %28, %30 : vector<50x64xf32>
    %cst_13 = arith.constant 0.000000e+00 : f32
    %32 = vector.broadcast %cst_13 : f32 to vector<50x64xf32>
    %33 = arith.maximumf %31, %32 : vector<50x64xf32>
    %cst_14 = arith.constant 0.000000e+00 : f32
    %34 = vector.broadcast %cst_14 : f32 to vector<2x128xf32>
    %35 = vector.extract_strided_slice %33 {offsets = [0, 0], sizes = [2, 64], strides = [1, 1]} : vector<50x64xf32> to vector<2x64xf32>
    %36 = vector.extract_strided_slice %33 {offsets = [2, 0], sizes = [2, 64], strides = [1, 1]} : vector<50x64xf32> to vector<2x64xf32>
    %37 = vector.extract_strided_slice %33 {offsets = [4, 0], sizes = [2, 64], strides = [1, 1]} : vector<50x64xf32> to vector<2x64xf32>
    %38 = vector.extract_strided_slice %33 {offsets = [6, 0], sizes = [2, 64], strides = [1, 1]} : vector<50x64xf32> to vector<2x64xf32>
    %39 = tpu.concatenate %35, %36, %37, %38 in 1 : vector<2x64xf32>, vector<2x64xf32>, vector<2x64xf32>, vector<2x64xf32> -> vector<2x256xf32>
    %c0_15 = arith.constant 0 : index
    %c0_16 = arith.constant 0 : index
    %c0_17 = arith.constant 0 : index
    %40 = vector.load %arg6[%c0_15, %c0_16, %c0_17] : memref<7x256x128xf32, #tpu.memory_space<vmem>>, vector<1x256x128xf32>
    %41 = vector.shape_cast %40 : vector<1x256x128xf32> to vector<256x128xf32>
    %cst_18 = arith.constant dense<0.000000e+00> : vector<2x128xf32>
    %42 = tpu.matmul %39, %41, %cst_18 {dimension_numbers = #tpu.dot_dimension_numbers<[1], [0], [0], [1], [0, 0, 1, 1], [], []>} : vector<2x256xf32>, vector<256x128xf32>, vector<2x128xf32> -> vector<2x128xf32>
    %43 = arith.addf %34, %42 : vector<2x128xf32>
    %44 = vector.extract_strided_slice %33 {offsets = [8, 0], sizes = [2, 64], strides = [1, 1]} : vector<50x64xf32> to vector<2x64xf32>
    %45 = vector.extract_strided_slice %33 {offsets = [10, 0], sizes = [2, 64], strides = [1, 1]} : vector<50x64xf32> to vector<2x64xf32>
    %46 = vector.extract_strided_slice %33 {offsets = [12, 0], sizes = [2, 64], strides = [1, 1]} : vector<50x64xf32> to vector<2x64xf32>
    %47 = vector.extract_strided_slice %33 {offsets = [14, 0], sizes = [2, 64], strides = [1, 1]} : vector<50x64xf32> to vector<2x64xf32>
    %48 = tpu.concatenate %44, %45, %46, %47 in 1 : vector<2x64xf32>, vector<2x64xf32>, vector<2x64xf32>, vector<2x64xf32> -> vector<2x256xf32>
    %c1 = arith.constant 1 : index
    %c0_19 = arith.constant 0 : index
    %c0_20 = arith.constant 0 : index
    %49 = vector.load %arg6[%c1, %c0_19, %c0_20] : memref<7x256x128xf32, #tpu.memory_space<vmem>>, vector<1x256x128xf32>
    %50 = vector.shape_cast %49 : vector<1x256x128xf32> to vector<256x128xf32>
    %cst_21 = arith.constant dense<0.000000e+00> : vector<2x128xf32>
    %51 = tpu.matmul %48, %50, %cst_21 {dimension_numbers = #tpu.dot_dimension_numbers<[1], [0], [0], [1], [0, 0, 1, 1], [], []>} : vector<2x256xf32>, vector<256x128xf32>, vector<2x128xf32> -> vector<2x128xf32>
    %52 = arith.addf %43, %51 : vector<2x128xf32>
    %53 = vector.extract_strided_slice %33 {offsets = [16, 0], sizes = [2, 64], strides = [1, 1]} : vector<50x64xf32> to vector<2x64xf32>
    %54 = vector.extract_strided_slice %33 {offsets = [18, 0], sizes = [2, 64], strides = [1, 1]} : vector<50x64xf32> to vector<2x64xf32>
    %55 = vector.extract_strided_slice %33 {offsets = [20, 0], sizes = [2, 64], strides = [1, 1]} : vector<50x64xf32> to vector<2x64xf32>
    %56 = vector.extract_strided_slice %33 {offsets = [22, 0], sizes = [2, 64], strides = [1, 1]} : vector<50x64xf32> to vector<2x64xf32>
    %57 = tpu.concatenate %53, %54, %55, %56 in 1 : vector<2x64xf32>, vector<2x64xf32>, vector<2x64xf32>, vector<2x64xf32> -> vector<2x256xf32>
    %c2 = arith.constant 2 : index
    %c0_22 = arith.constant 0 : index
    %c0_23 = arith.constant 0 : index
    %58 = vector.load %arg6[%c2, %c0_22, %c0_23] : memref<7x256x128xf32, #tpu.memory_space<vmem>>, vector<1x256x128xf32>
    %59 = vector.shape_cast %58 : vector<1x256x128xf32> to vector<256x128xf32>
    %cst_24 = arith.constant dense<0.000000e+00> : vector<2x128xf32>
    %60 = tpu.matmul %57, %59, %cst_24 {dimension_numbers = #tpu.dot_dimension_numbers<[1], [0], [0], [1], [0, 0, 1, 1], [], []>} : vector<2x256xf32>, vector<256x128xf32>, vector<2x128xf32> -> vector<2x128xf32>
    %61 = arith.addf %52, %60 : vector<2x128xf32>
    %62 = vector.extract_strided_slice %33 {offsets = [24, 0], sizes = [2, 64], strides = [1, 1]} : vector<50x64xf32> to vector<2x64xf32>
    %63 = vector.extract_strided_slice %33 {offsets = [26, 0], sizes = [2, 64], strides = [1, 1]} : vector<50x64xf32> to vector<2x64xf32>
    %64 = vector.extract_strided_slice %33 {offsets = [28, 0], sizes = [2, 64], strides = [1, 1]} : vector<50x64xf32> to vector<2x64xf32>
    %65 = vector.extract_strided_slice %33 {offsets = [30, 0], sizes = [2, 64], strides = [1, 1]} : vector<50x64xf32> to vector<2x64xf32>
    %66 = tpu.concatenate %62, %63, %64, %65 in 1 : vector<2x64xf32>, vector<2x64xf32>, vector<2x64xf32>, vector<2x64xf32> -> vector<2x256xf32>
    %c3 = arith.constant 3 : index
    %c0_25 = arith.constant 0 : index
    %c0_26 = arith.constant 0 : index
    %67 = vector.load %arg6[%c3, %c0_25, %c0_26] : memref<7x256x128xf32, #tpu.memory_space<vmem>>, vector<1x256x128xf32>
    %68 = vector.shape_cast %67 : vector<1x256x128xf32> to vector<256x128xf32>
    %cst_27 = arith.constant dense<0.000000e+00> : vector<2x128xf32>
    %69 = tpu.matmul %66, %68, %cst_27 {dimension_numbers = #tpu.dot_dimension_numbers<[1], [0], [0], [1], [0, 0, 1, 1], [], []>} : vector<2x256xf32>, vector<256x128xf32>, vector<2x128xf32> -> vector<2x128xf32>
    %70 = arith.addf %61, %69 : vector<2x128xf32>
    %71 = vector.extract_strided_slice %33 {offsets = [32, 0], sizes = [2, 64], strides = [1, 1]} : vector<50x64xf32> to vector<2x64xf32>
    %72 = vector.extract_strided_slice %33 {offsets = [34, 0], sizes = [2, 64], strides = [1, 1]} : vector<50x64xf32> to vector<2x64xf32>
    %73 = vector.extract_strided_slice %33 {offsets = [36, 0], sizes = [2, 64], strides = [1, 1]} : vector<50x64xf32> to vector<2x64xf32>
    %74 = vector.extract_strided_slice %33 {offsets = [38, 0], sizes = [2, 64], strides = [1, 1]} : vector<50x64xf32> to vector<2x64xf32>
    %75 = tpu.concatenate %71, %72, %73, %74 in 1 : vector<2x64xf32>, vector<2x64xf32>, vector<2x64xf32>, vector<2x64xf32> -> vector<2x256xf32>
    %c4 = arith.constant 4 : index
    %c0_28 = arith.constant 0 : index
    %c0_29 = arith.constant 0 : index
    %76 = vector.load %arg6[%c4, %c0_28, %c0_29] : memref<7x256x128xf32, #tpu.memory_space<vmem>>, vector<1x256x128xf32>
    %77 = vector.shape_cast %76 : vector<1x256x128xf32> to vector<256x128xf32>
    %cst_30 = arith.constant dense<0.000000e+00> : vector<2x128xf32>
    %78 = tpu.matmul %75, %77, %cst_30 {dimension_numbers = #tpu.dot_dimension_numbers<[1], [0], [0], [1], [0, 0, 1, 1], [], []>} : vector<2x256xf32>, vector<256x128xf32>, vector<2x128xf32> -> vector<2x128xf32>
    %79 = arith.addf %70, %78 : vector<2x128xf32>
    %80 = vector.extract_strided_slice %33 {offsets = [40, 0], sizes = [2, 64], strides = [1, 1]} : vector<50x64xf32> to vector<2x64xf32>
    %81 = vector.extract_strided_slice %33 {offsets = [42, 0], sizes = [2, 64], strides = [1, 1]} : vector<50x64xf32> to vector<2x64xf32>
    %82 = vector.extract_strided_slice %33 {offsets = [44, 0], sizes = [2, 64], strides = [1, 1]} : vector<50x64xf32> to vector<2x64xf32>
    %83 = vector.extract_strided_slice %33 {offsets = [46, 0], sizes = [2, 64], strides = [1, 1]} : vector<50x64xf32> to vector<2x64xf32>
    %84 = tpu.concatenate %80, %81, %82, %83 in 1 : vector<2x64xf32>, vector<2x64xf32>, vector<2x64xf32>, vector<2x64xf32> -> vector<2x256xf32>
    %c5 = arith.constant 5 : index
    %c0_31 = arith.constant 0 : index
    %c0_32 = arith.constant 0 : index
    %85 = vector.load %arg6[%c5, %c0_31, %c0_32] : memref<7x256x128xf32, #tpu.memory_space<vmem>>, vector<1x256x128xf32>
    %86 = vector.shape_cast %85 : vector<1x256x128xf32> to vector<256x128xf32>
    %cst_33 = arith.constant dense<0.000000e+00> : vector<2x128xf32>
    %87 = tpu.matmul %84, %86, %cst_33 {dimension_numbers = #tpu.dot_dimension_numbers<[1], [0], [0], [1], [0, 0, 1, 1], [], []>} : vector<2x256xf32>, vector<256x128xf32>, vector<2x128xf32> -> vector<2x128xf32>
    %88 = arith.addf %79, %87 : vector<2x128xf32>
    %89 = vector.extract_strided_slice %33 {offsets = [42, 0], sizes = [2, 64], strides = [1, 1]} : vector<50x64xf32> to vector<2x64xf32>
    %90 = vector.extract_strided_slice %33 {offsets = [44, 0], sizes = [2, 64], strides = [1, 1]} : vector<50x64xf32> to vector<2x64xf32>
    %91 = vector.extract_strided_slice %33 {offsets = [46, 0], sizes = [2, 64], strides = [1, 1]} : vector<50x64xf32> to vector<2x64xf32>
    %92 = vector.extract_strided_slice %33 {offsets = [48, 0], sizes = [2, 64], strides = [1, 1]} : vector<50x64xf32> to vector<2x64xf32>
    %93 = tpu.concatenate %89, %90, %91, %92 in 1 : vector<2x64xf32>, vector<2x64xf32>, vector<2x64xf32>, vector<2x64xf32> -> vector<2x256xf32>
    %c6 = arith.constant 6 : index
    %c0_34 = arith.constant 0 : index
    %c0_35 = arith.constant 0 : index
    %94 = vector.load %arg6[%c6, %c0_34, %c0_35] : memref<7x256x128xf32, #tpu.memory_space<vmem>>, vector<1x256x128xf32>
    %95 = vector.shape_cast %94 : vector<1x256x128xf32> to vector<256x128xf32>
    %cst_36 = arith.constant dense<0.000000e+00> : vector<2x128xf32>
    %96 = tpu.matmul %93, %95, %cst_36 {dimension_numbers = #tpu.dot_dimension_numbers<[1], [0], [0], [1], [0, 0, 1, 1], [], []>} : vector<2x256xf32>, vector<256x128xf32>, vector<2x128xf32> -> vector<2x128xf32>
    %97 = arith.addf %88, %96 : vector<2x128xf32>
    %c0_37 = arith.constant 0 : index
    %c0_38 = arith.constant 0 : index
    %98 = vector.load %arg7[%c0_37, %c0_38] : memref<1x128xf32, #tpu.memory_space<vmem>>, vector<1x128xf32>
    %99 = vector.broadcast %98 : vector<1x128xf32> to vector<2x128xf32>
    %100 = arith.addf %97, %99 : vector<2x128xf32>
    %cst_39 = arith.constant 0.000000e+00 : f32
    %101 = vector.broadcast %cst_39 : f32 to vector<2x128xf32>
    %102 = arith.maximumf %100, %101 : vector<2x128xf32>
    %c0_40 = arith.constant 0 : index
    %c0_41 = arith.constant 0 : index
    %103 = vector.load %arg8[%c0_40, %c0_41] : memref<128x128xf32, #tpu.memory_space<vmem>>, vector<128x128xf32>
    %cst_42 = arith.constant dense<0.000000e+00> : vector<2x128xf32>
    %104 = tpu.matmul %102, %103, %cst_42 {dimension_numbers = #tpu.dot_dimension_numbers<[1], [0], [0], [1], [0, 0, 1, 1], [], []>} : vector<2x128xf32>, vector<128x128xf32>, vector<2x128xf32> -> vector<2x128xf32>
    %c0_43 = arith.constant 0 : index
    %c0_44 = arith.constant 0 : index
    %105 = vector.load %arg9[%c0_43, %c0_44] : memref<1x128xf32, #tpu.memory_space<vmem>>, vector<1x128xf32>
    %106 = vector.broadcast %105 : vector<1x128xf32> to vector<2x128xf32>
    %107 = arith.addf %104, %106 : vector<2x128xf32>
    %c0_45 = arith.constant 0 : index
    %c0_46 = arith.constant 0 : index
    %108 = vector.load %arg10[%c0_45, %c0_46] : memref<2x128xf32, #tpu.memory_space<vmem>>, vector<2x128xf32>
    tpu.vector_store %arg10[%c0_45, %c0_46], %107 {strides = array<i32>} : memref<2x128xf32, #tpu.memory_space<vmem>>, vector<2x128xf32>,
    return
  }
  func.func @transform_0(%arg0: i32) -> (i32, i32) {
    %c0_i32 = arith.constant 0 : i32
    %c0_i32_0 = arith.constant 0 : i32
    return %arg0, %c0_i32 : i32, i32
  }
  func.func @transform_1(%arg0: i32) -> (i32, i32) {
    %c0_i32 = arith.constant 0 : i32
    %c0_i32_0 = arith.constant 0 : i32
    %c0_i32_1 = arith.constant 0 : i32
    return %c0_i32, %c0_i32_0 : i32, i32
  }
  func.func @transform_2(%arg0: i32) -> (i32, i32) {
    %c0_i32 = arith.constant 0 : i32
    %c0_i32_0 = arith.constant 0 : i32
    %c0_i32_1 = arith.constant 0 : i32
    return %c0_i32, %c0_i32_0 : i32, i32
  }
  func.func @transform_3(%arg0: i32) -> (i32, i32) {
    %c0_i32 = arith.constant 0 : i32
    %c0_i32_0 = arith.constant 0 : i32
    %c0_i32_1 = arith.constant 0 : i32
    return %c0_i32, %c0_i32_0 : i32, i32
  }
  func.func @transform_4(%arg0: i32) -> (i32, i32) {
    %c0_i32 = arith.constant 0 : i32
    %c0_i32_0 = arith.constant 0 : i32
    %c0_i32_1 = arith.constant 0 : i32
    return %c0_i32, %c0_i32_0 : i32, i32
  }
  func.func @transform_5(%arg0: i32) -> (i32, i32, i32) {
    %c0_i32 = arith.constant 0 : i32
    %c0_i32_0 = arith.constant 0 : i32
    %c0_i32_1 = arith.constant 0 : i32
    %c0_i32_2 = arith.constant 0 : i32
    return %c0_i32, %c0_i32_0, %c0_i32_1 : i32, i32, i32
  }
  func.func @transform_6(%arg0: i32) -> (i32, i32) {
    %c0_i32 = arith.constant 0 : i32
    %c0_i32_0 = arith.constant 0 : i32
    %c0_i32_1 = arith.constant 0 : i32
    return %c0_i32, %c0_i32_0 : i32, i32
  }
  func.func @transform_7(%arg0: i32) -> (i32, i32) {
    %c0_i32 = arith.constant 0 : i32
    %c0_i32_0 = arith.constant 0 : i32
    %c0_i32_1 = arith.constant 0 : i32
    return %c0_i32, %c0_i32_0 : i32, i32
  }
  func.func @transform_8(%arg0: i32) -> (i32, i32) {
    %c0_i32 = arith.constant 0 : i32
    %c0_i32_0 = arith.constant 0 : i32
    %c0_i32_1 = arith.constant 0 : i32
    return %c0_i32, %c0_i32_0 : i32, i32
  }
  func.func @transform_9(%arg0: i32) -> (i32, i32) {
    %c0_i32 = arith.constant 0 : i32
    %c0_i32_0 = arith.constant 0 : i32
    return %arg0, %c0_i32 : i32, i32
  }
}

</mosaic_0001>

<llo_original>
// kernel: convnet1d_forward.1
$region0: #{convnet1d_forward.1}
  #allocation0 [shape = 'u32[]', space=smem, size = 0x4, offset = 0x4, fixed_abs, tag = 'smem constant byte address 0x4 - core index']
  #allocation1 [shape = 'u32[72,128]{1,0:T(1,128)}', space=vmem, size = 0x9000, scoped, tag = 'internal scratch']
  %s0 = inlined_call_operand.vmem [shape: f32[50,6], index: 0, kind: input, shape index: {}]
  %s1 = inlined_call_operand.vmem [shape: f32[6,128], index: 1, kind: input, shape index: {}]
  %s2 = inlined_call_operand.vmem [shape: f32[1,32], index: 2, kind: input, shape index: {}]
  %s3 = inlined_call_operand.vmem [shape: f32[128,128], index: 3, kind: input, shape index: {}]
  %s4 = inlined_call_operand.vmem [shape: f32[1,64], index: 4, kind: input, shape index: {}]
  %s5 = inlined_call_operand.hbm [shape: f32[7,256,128], index: 5, kind: input, shape index: {}]
  %s6 = inlined_call_operand.vmem [shape: f32[1,128], index: 6, kind: input, shape index: {}]
  %s7 = inlined_call_operand.vmem [shape: f32[128,128], index: 7, kind: input, shape index: {}]
  %s8 = inlined_call_operand.vmem [shape: f32[1,128], index: 8, kind: input, shape index: {}]
  %s9 = inlined_call_operand.hbm [shape: f32[2,128], index: 9, kind: output, shape index: {}]
  %s10 = sld [smem:[#allocation0]]
  $region50: #{convnet1d_forward.1} parent=0
    _
  %s12 = ssub.s32 1, %s10
  %s13 = scalar_select 0, %s12, %s10
  $region1: #{convnet1d_forward.1} parent=0
    #allocation2 [shape = 'u8[917504]{0}', space=vmem, size = 0xe0000, scoped, tag = 'input window, operand 5, single buffered']
    #allocation3 [shape = 's32[1]{0}', space=sflag, size = 0x4, scoped, tag = 'scoped memory for convnet1d_forward.1']
    #allocation4 [shape = 's32[1]{0}', space=sflag, size = 0x4, scoped, tag = 'scoped memory for convnet1d_forward.1']
    #allocation5 [shape = 'u8[1024]{0}', space=vmem, size = 0x400, scoped, tag = 'output window, operand 0, single buffered']
    %14 = vsyncpa [#allocation3], 0
    %15 = vsyncpa [#allocation4], 0
    // Predicated region
    $region2: #{convnet1d_forward.1} parent=1 // pred_check
      _
    $region3: #{convnet1d_forward.1} parent=1 // pred_check_branch
      %17 = sbr.rel (0) target = $region5
    $region4: #{convnet1d_forward.1} parent=1 // pred_region
      _
    $region5: #{convnet1d_forward.1} parent=1 // pred_fallthru
      _
    // Predicated region
    $region6: #{convnet1d_forward.1} parent=1 // pred_check
      _
    $region7: #{convnet1d_forward.1} parent=1 // pred_check_branch
      %19 = sbr.rel (0) target = $region9
    $region8: #{convnet1d_forward.1} parent=1 // pred_region
      _
    $region9: #{convnet1d_forward.1} parent=1 // pred_fallthru
      _
    // Predicated region
    $region10: #{convnet1d_forward.1} parent=1 // pred_check
      _
    $region11: #{convnet1d_forward.1} parent=1 // pred_check_branch
      %21 = sbr.rel (0) target = $region13
    $region12: #{convnet1d_forward.1} parent=1 // pred_region
      _
    $region13: #{convnet1d_forward.1} parent=1 // pred_fallthru
      _
    // Predicated region
    $region14: #{convnet1d_forward.1} parent=1 // pred_check
      _
    $region15: #{convnet1d_forward.1} parent=1 // pred_check_branch
      %23 = sbr.rel (0) target = $region17
    $region16: #{convnet1d_forward.1} parent=1 // pred_region
      _
    $region17: #{convnet1d_forward.1} parent=1 // pred_fallthru
      _
    // Predicated region
    $region18: #{convnet1d_forward.1} parent=1 // pred_check
      _
    $region19: #{convnet1d_forward.1} parent=1 // pred_check_branch
      %25 = sbr.rel (0) target = $region21
    $region20: #{convnet1d_forward.1} parent=1 // pred_region
      _
    $region21: #{convnet1d_forward.1} parent=1 // pred_fallthru
      _
    // Predicated region
    $region22: #{convnet1d_forward.1} parent=1 // pred_check
      _
    $region23: #{convnet1d_forward.1} parent=1 // pred_check_branch
      %27 = sbr.rel (0) target = $region25
    $region24: #{convnet1d_forward.1} parent=1 // pred_region
      %29 = vsyncadd [#allocation3], 0
      %s30 = sshll.u32 %s5, 4
      %s31 = int_to_ptr.hbm [resolvable:$true] %s30
      %s32 = sshll.u32 [#allocation2], 4
      %s33 = int_to_ptr.vmem [resolvable:$true] %s32
      %38 = dma.hbm_to_vmem [thread:$0]  %s31, 28672, %s33, [#allocation3], 128, 128, 8
    $region25: #{convnet1d_forward.1} parent=1 // pred_fallthru
      _
    // Predicated region
    $region26: #{convnet1d_forward.1} parent=1 // pred_check
      _
    $region27: #{convnet1d_forward.1} parent=1 // pred_check_branch
      %40 = sbr.rel (0) target = $region29
    $region28: #{convnet1d_forward.1} parent=1 // pred_region
      _
    $region29: #{convnet1d_forward.1} parent=1 // pred_fallthru
      _
    // Predicated region
    $region30: #{convnet1d_forward.1} parent=1 // pred_check
      _
    $region31: #{convnet1d_forward.1} parent=1 // pred_check_branch
      %42 = sbr.rel (0) target = $region33
    $region32: #{convnet1d_forward.1} parent=1 // pred_region
      _
    $region33: #{convnet1d_forward.1} parent=1 // pred_fallthru
      _
    // Predicated region
    $region34: #{convnet1d_forward.1} parent=1 // pred_check
      _
    $region35: #{convnet1d_forward.1} parent=1 // pred_check_branch
      %44 = sbr.rel (0) target = $region37
    $region36: #{convnet1d_forward.1} parent=1 // pred_region
      _
    $region37: #{convnet1d_forward.1} parent=1 // pred_fallthru
      _
    // Predicated region
    $region38: #{convnet1d_forward.1} parent=1 // pred_check
      _
    $region39: #{convnet1d_forward.1} parent=1 // pred_check_branch
      %46 = sbr.rel (0) target = $region41
    $region40: #{convnet1d_forward.1} parent=1 // pred_region
      %48 = dma.done [#allocation3], 28672
    $region41: #{convnet1d_forward.1} parent=1 // pred_fallthru
      _
    %v49 = vld [vmem:[%s0] sm:$0xff]
    %v50 = vld [vmem:[%s0 + $0x8] sm:$0xff]
    %v51 = vld [vmem:[%s0 + $0x10] sm:$0xff]
    %v52 = vld [vmem:[%s0 + $0x18] sm:$0xff]
    %v53 = vld [vmem:[%s0 + $0x20] sm:$0xff]
    %v54 = vld [vmem:[%s0 + $0x28] sm:$0xff]
    %v55 = vld [vmem:[%s0 + $0x30] sm:$0x3]
    %v56 = vld [vmem:[%s1] sm:$0x3f]
    %vm57 = vcmask 48128
    %v59 = vsel %vm57, %v49, 0
    %v62 = vsel %vm57, %v50, 0
    %v65 = vsel %vm57, %v51, 0
    %v68 = vsel %vm57, %v52, 0
    %v71 = vsel %vm57, %v53, 0
    %v74 = vsel %vm57, %v54, 0
    %v77 = vsel %vm57, %v55, 0
    %vm79 = vcmask 1045504
    %v81 = vsel %vm79, %v56, 0
    %83 = vmatpush.msra.mxu0 0.0
    %84 = vmatpush.msra.mxu0 0.0
    %85 = vmatpush.msra.mxu0 0.0
    %86 = vmatpush.msra.mxu0 0.0
    %87 = vmatpush.msra.mxu0 0.0
    %88 = vmatpush.msra.mxu0 0.0
    %89 = vmatpush.msra.mxu0 0.0
    %90 = vmatpush.msra.mxu0 0.0
    %91 = vmatpush.msra.mxu0 0.0
    %92 = vmatpush.msra.mxu0 0.0
    %93 = vmatpush.msra.mxu0 0.0
    %94 = vmatpush.msra.mxu0 0.0
    %95 = vmatpush.msra.mxu0 0.0
    %96 = vmatpush.msra.mxu0 0.0
    %97 = vmatpush.msra.mxu0 0.0
    %98 = vmatpush.msra.mxu0 %v81
    %99 = vmatmul.f32.gmra.mxu0 %v59
    %v100 = vpop.f32.mrf.mxu0
    %v101 = vadd.f32 0.0, %v100
    %102 = vmatmul.f32.gmra.mxu0 %v62
    %v103 = vpop.f32.mrf.mxu0
    %v104 = vadd.f32 0.0, %v103
    %105 = vmatmul.f32.gmra.mxu0 %v65
    %v106 = vpop.f32.mrf.mxu0
    %v107 = vadd.f32 0.0, %v106
    %108 = vmatmul.f32.gmra.mxu0 %v68
    %v109 = vpop.f32.mrf.mxu0
    %v110 = vadd.f32 0.0, %v109
    %111 = vmatmul.f32.gmra.mxu0 %v71
    %v112 = vpop.f32.mrf.mxu0
    %v113 = vadd.f32 0.0, %v112
    %114 = vmatmul.f32.gmra.mxu0 %v74
    %v115 = vpop.f32.mrf.mxu0
    %v116 = vadd.f32 0.0, %v115
    %117 = vmatmul.f32.gmra.mxu0 %v77
    %v118 = vpop.f32.mrf.mxu0
    %v119 = vadd.f32 0.0, %v118
    %120 = vdwg.mxu0
    %v121 = vld [vmem:[%s2] sm:$0x1]
    %129 = vrot.lane.b32.xlu0 %v101, 96
    %v130 = vpop.permute.xlu0 %129
    %131 = vrot.lane.b32.xlu0 %v104, 96
    %v132 = vpop.permute.xlu0 %131
    %133 = vrot.lane.b32.xlu0 %v107, 96
    %v134 = vpop.permute.xlu0 %133
    %135 = vrot.lane.b32.xlu0 %v110, 96
    %v136 = vpop.permute.xlu0 %135
    %137 = vrot.lane.b32.xlu0 %v113, 96
    %v138 = vpop.permute.xlu0 %137
    %139 = vrot.lane.b32.xlu0 %v116, 96
    %v140 = vpop.permute.xlu0 %139
    %141 = vrot.lane.b32.xlu0 %v119, 96
    %v142 = vpop.permute.xlu0 %141
    %v150 = vmax.f32 %v101, %v130
    %v151 = vmax.f32 %v104, %v132
    %v152 = vmax.f32 %v107, %v134
    %v153 = vmax.f32 %v110, %v136
    %v154 = vmax.f32 %v113, %v138
    %v155 = vmax.f32 %v116, %v140
    %v156 = vmax.f32 %v119, %v142
    %v158 = vperm.slane %v121, 0
    %v160 = vadd.f32 %v150, %v158
    %v161 = vadd.f32 %v151, %v158
    %v162 = vadd.f32 %v152, %v158
    %v163 = vadd.f32 %v153, %v158
    %v164 = vadd.f32 %v154, %v158
    %v165 = vadd.f32 %v155, %v158
    %v166 = vadd.f32 %v156, %v158
    %v167 = vmax.f32 %v160, 0.0
    %v168 = vmax.f32 %v161, 0.0
    %v169 = vmax.f32 %v162, 0.0
    %v170 = vmax.f32 %v163, 0.0
    %v171 = vmax.f32 %v164, 0.0
    %v172 = vmax.f32 %v165, 0.0
    %v173 = vmax.f32 %v166, 0.0
    %174 = vrot.lane.b32.xlu0 %v158, 64
    %v175 = vpop.permute.xlu0 %174
    %v177 = vadd.f32 %v150, %v175
    %v178 = vadd.f32 %v151, %v175
    %v179 = vadd.f32 %v152, %v175
    %v180 = vadd.f32 %v153, %v175
    %v181 = vadd.f32 %v154, %v175
    %v182 = vadd.f32 %v155, %v175
    %v183 = vadd.f32 %v156, %v175
    %v184 = vmax.f32 %v177, 0.0
    %v185 = vmax.f32 %v178, 0.0
    %v186 = vmax.f32 %v179, 0.0
    %v187 = vmax.f32 %v180, 0.0
    %v188 = vmax.f32 %v181, 0.0
    %v189 = vmax.f32 %v182, 0.0
    %v190 = vmax.f32 %v183, 0.0
    %vm197 = vcmask 1041408
    %v198 = vrot.slane %v184, 6
    %v199 = vrot.slane %v185, 6
    %v200 = vsel %vm197, %v198, %v199
    %v201 = vrot.slane %v186, 6
    %v202 = vsel %vm197, %v199, %v201
    %v203 = vrot.slane %v187, 6
    %v204 = vsel %vm197, %v201, %v203
    %v205 = vrot.slane %v188, 6
    %v206 = vsel %vm197, %v203, %v205
    %v207 = vrot.slane %v189, 6
    %v208 = vsel %vm197, %v205, %v207
    %209 = vrot.lane.b32.xlu0 %v198, 64
    %v210 = vpop.permute.xlu0 %209
    %211 = vrot.lane.b32.xlu0 %v200, 64
    %v212 = vpop.permute.xlu0 %211
    %213 = vrot.lane.b32.xlu0 %v202, 64
    %v214 = vpop.permute.xlu0 %213
    %215 = vrot.lane.b32.xlu0 %v204, 64
    %v216 = vpop.permute.xlu0 %215
    %217 = vrot.lane.b32.xlu0 %v206, 64
    %v218 = vpop.permute.xlu0 %217
    %219 = vrot.lane.b32.xlu0 %v208, 64
    %v220 = vpop.permute.xlu0 %219
    %221 = vrot.lane.b32.xlu0 %v207, 64
    %v222 = vpop.permute.xlu0 %221
    %v230 = vsel %vm197, 0.0, %v210
    %v238 = vrot.slane %v167, 2
    %v239 = vrot.slane %v168, 2
    %v240 = vsel %vm79, %v238, %v239
    %v241 = vrot.slane %v169, 2
    %v242 = vsel %vm79, %v239, %v241
    %v243 = vrot.slane %v170, 2
    %v244 = vsel %vm79, %v241, %v243
    %v245 = vrot.slane %v171, 2
    %v246 = vsel %vm79, %v243, %v245
    %v247 = vrot.slane %v172, 2
    %v248 = vsel %vm79, %v245, %v247
    %v249 = vrot.slane %v173, 2
    %v250 = vsel %vm79, %v247, %v249
    %251 = vrot.lane.b32.xlu0 %v167, 32
    %v252 = vpop.permute.xlu0 %251
    %253 = vrot.lane.b32.xlu0 %v168, 32
    %v254 = vpop.permute.xlu0 %253
    %255 = vrot.lane.b32.xlu0 %v169, 32
    %v256 = vpop.permute.xlu0 %255
    %257 = vrot.lane.b32.xlu0 %v170, 32
    %v258 = vpop.permute.xlu0 %257
    %259 = vrot.lane.b32.xlu0 %v171, 32
    %v260 = vpop.permute.xlu0 %259
    %261 = vrot.lane.b32.xlu0 %v172, 32
    %v262 = vpop.permute.xlu0 %261
    %263 = vrot.lane.b32.xlu0 %v173, 32
    %v264 = vpop.permute.xlu0 %263
    %273 = vrot.lane.b32.xlu0 %v240, 96
    %v274 = vpop.permute.xlu0 %273
    %275 = vrot.lane.b32.xlu0 %v242, 96
    %v276 = vpop.permute.xlu0 %275
    %277 = vrot.lane.b32.xlu0 %v244, 96
    %v278 = vpop.permute.xlu0 %277
    %279 = vrot.lane.b32.xlu0 %v246, 96
    %v280 = vpop.permute.xlu0 %279
    %281 = vrot.lane.b32.xlu0 %v248, 96
    %v282 = vpop.permute.xlu0 %281
    %283 = vrot.lane.b32.xlu0 %v250, 96
    %v284 = vpop.permute.xlu0 %283
    %285 = vrot.lane.b32.xlu0 0.0, 96
    %v286 = vpop.permute.xlu0 %285
    %vm294 = vcmask 261120
    %v295 = vsel %vm294, %v230, %v252
    %v296 = vsel %vm294, %v212, %v254
    %v297 = vsel %vm294, %v214, %v256
    %v298 = vsel %vm294, %v216, %v258
    %v299 = vsel %vm294, %v218, %v260
    %v300 = vsel %vm294, %v220, %v262
    %v301 = vsel %vm294, %v222, %v264
    %vm302 = vcmask 523264
    %v303 = vsel %vm302, %v295, %v184
    %v304 = vsel %vm302, %v296, %v185
    %v305 = vsel %vm302, %v297, %v186
    %v306 = vsel %vm302, %v298, %v187
    %v307 = vsel %vm302, %v299, %v188
    %v308 = vsel %vm302, %v300, %v189
    %v309 = vsel %vm302, %v301, %v190
    %vm310 = vcmask 785408
    %v311 = vsel %vm310, %v303, %v274
    %v312 = vsel %vm310, %v304, %v276
    %v313 = vsel %vm310, %v305, %v278
    %v314 = vsel %vm310, %v306, %v280
    %v315 = vsel %vm310, %v307, %v282
    %v316 = vsel %vm310, %v308, %v284
    %v317 = vsel %vm310, %v309, %v286
    %v318 = vld [vmem:[%s3] sm:$0xff]
    %v319 = vld [vmem:[%s3 + $0x8] sm:$0xff]
    %v320 = vld [vmem:[%s3 + $0x10] sm:$0xff]
    %v321 = vld [vmem:[%s3 + $0x18] sm:$0xff]
    %v322 = vld [vmem:[%s3 + $0x20] sm:$0xff]
    %v323 = vld [vmem:[%s3 + $0x28] sm:$0xff]
    %v324 = vld [vmem:[%s3 + $0x30] sm:$0xff]
    %v325 = vld [vmem:[%s3 + $0x38] sm:$0xff]
    %v326 = vld [vmem:[%s3 + $0x40] sm:$0xff]
    %v327 = vld [vmem:[%s3 + $0x48] sm:$0xff]
    %v328 = vld [vmem:[%s3 + $0x50] sm:$0xff]
    %v329 = vld [vmem:[%s3 + $0x58] sm:$0xff]
    %v330 = vld [vmem:[%s3 + $0x60] sm:$0xff]
    %v331 = vld [vmem:[%s3 + $0x68] sm:$0xff]
    %v332 = vld [vmem:[%s3 + $0x70] sm:$0xff]
    %v333 = vld [vmem:[%s3 + $0x78] sm:$0xff]
    %334 = vmatpush.msra.mxu0 %v333
    %335 = vmatpush.msra.mxu0 %v332
    %336 = vmatpush.msra.mxu0 %v331
    %337 = vmatpush.msra.mxu0 %v330
    %338 = vmatpush.msra.mxu0 %v329
    %339 = vmatpush.msra.mxu0 %v328
    %340 = vmatpush.msra.mxu0 %v327
    %341 = vmatpush.msra.mxu0 %v326
    %342 = vmatpush.msra.mxu0 %v325
    %343 = vmatpush.msra.mxu0 %v324
    %344 = vmatpush.msra.mxu0 %v323
    %345 = vmatpush.msra.mxu0 %v322
    %346 = vmatpush.msra.mxu0 %v321
    %347 = vmatpush.msra.mxu0 %v320
    %348 = vmatpush.msra.mxu0 %v319
    %349 = vmatpush.msra.mxu0 %v318
    %350 = vmatmul.f32.gmra.mxu0 %v311
    %v351 = vpop.f32.mrf.mxu0
    %v352 = vadd.f32 0.0, %v351
    %353 = vmatmul.f32.gmra.mxu0 %v312
    %v354 = vpop.f32.mrf.mxu0
    %v355 = vadd.f32 0.0, %v354
    %356 = vmatmul.f32.gmra.mxu0 %v313
    %v357 = vpop.f32.mrf.mxu0
    %v358 = vadd.f32 0.0, %v357
    %359 = vmatmul.f32.gmra.mxu0 %v314
    %v360 = vpop.f32.mrf.mxu0
    %v361 = vadd.f32 0.0, %v360
    %362 = vmatmul.f32.gmra.mxu0 %v315
    %v363 = vpop.f32.mrf.mxu0
    %v364 = vadd.f32 0.0, %v363
    %365 = vmatmul.f32.gmra.mxu0 %v316
    %v366 = vpop.f32.mrf.mxu0
    %v367 = vadd.f32 0.0, %v366
    %368 = vmatmul.f32.gmra.mxu0 %v317
    %v369 = vpop.f32.mrf.mxu0
    %v370 = vadd.f32 0.0, %v369
    %371 = vdwg.mxu0
    %379 = vrot.lane.b32.xlu0 %v352, 64
    %v380 = vpop.permute.xlu0 %379
    %381 = vrot.lane.b32.xlu0 %v355, 64
    %v382 = vpop.permute.xlu0 %381
    %383 = vrot.lane.b32.xlu0 %v358, 64
    %v384 = vpop.permute.xlu0 %383
    %385 = vrot.lane.b32.xlu0 %v361, 64
    %v386 = vpop.permute.xlu0 %385
    %387 = vrot.lane.b32.xlu0 %v364, 64
    %v388 = vpop.permute.xlu0 %387
    %389 = vrot.lane.b32.xlu0 %v367, 64
    %v390 = vpop.permute.xlu0 %389
    %391 = vrot.lane.b32.xlu0 %v370, 64
    %v392 = vpop.permute.xlu0 %391
    %v400 = vmax.f32 %v352, %v380
    %v401 = vmax.f32 %v355, %v382
    %v402 = vmax.f32 %v358, %v384
    %v403 = vmax.f32 %v361, %v386
    %v404 = vmax.f32 %v364, %v388
    %v405 = vmax.f32 %v367, %v390
    %v406 = vmax.f32 %v370, %v392
    %v407 = vld [vmem:[%s4] sm:$0x1]
    %v409 = vperm.slane %v407, 0
    %v411 = vadd.f32 %v400, %v409
    %v412 = vadd.f32 %v401, %v409
    %v413 = vadd.f32 %v402, %v409
    %v414 = vadd.f32 %v403, %v409
    %v415 = vadd.f32 %v404, %v409
    %v416 = vadd.f32 %v405, %v409
    %v417 = vadd.f32 %v406, %v409
    %v418 = vmax.f32 %v411, 0.0
    %v419 = vmax.f32 %v412, 0.0
    %v420 = vmax.f32 %v413, 0.0
    %v421 = vmax.f32 %v414, 0.0
    %v422 = vmax.f32 %v415, 0.0
    %v423 = vmax.f32 %v416, 0.0
    %v424 = vmax.f32 %v417, 0.0
    %v426 = vrot.slane %v418, 2
    %427 = vrot.lane.b32.xlu0 %v426, 64
    %v428 = vpop.permute.xlu0 %427
    %v430 = vrot.slane %v418, 4
    %v432 = vrot.slane %v418, 6
    %433 = vrot.lane.b32.xlu0 %v432, 64
    %v434 = vpop.permute.xlu0 %433
    %v436 = vsel %vm302, %v418, %v428
    %v437 = vsel %vm302, %v430, %v434
    %v438 = vld [vmem:[#allocation2] sm:$0xff]
    %v439 = vld [vmem:[#allocation2 + $0x8] sm:$0xff]
    %v440 = vld [vmem:[#allocation2 + $0x10] sm:$0xff]
    %v441 = vld [vmem:[#allocation2 + $0x18] sm:$0xff]
    %v442 = vld [vmem:[#allocation2 + $0x20] sm:$0xff]
    %v443 = vld [vmem:[#allocation2 + $0x28] sm:$0xff]
    %v444 = vld [vmem:[#allocation2 + $0x30] sm:$0xff]
    %v445 = vld [vmem:[#allocation2 + $0x38] sm:$0xff]
    %v446 = vld [vmem:[#allocation2 + $0x40] sm:$0xff]
    %v447 = vld [vmem:[#allocation2 + $0x48] sm:$0xff]
    %v448 = vld [vmem:[#allocation2 + $0x50] sm:$0xff]
    %v449 = vld [vmem:[#allocation2 + $0x58] sm:$0xff]
    %v450 = vld [vmem:[#allocation2 + $0x60] sm:$0xff]
    %v451 = vld [vmem:[#allocation2 + $0x68] sm:$0xff]
    %v452 = vld [vmem:[#allocation2 + $0x70] sm:$0xff]
    %v453 = vld [vmem:[#allocation2 + $0x78] sm:$0xff]
    %v454 = vld [vmem:[#allocation2 + $0x80] sm:$0xff]
    %v455 = vld [vmem:[#allocation2 + $0x88] sm:$0xff]
    %v456 = vld [vmem:[#allocation2 + $0x90] sm:$0xff]
    %v457 = vld [vmem:[#allocation2 + $0x98] sm:$0xff]
    %v458 = vld [vmem:[#allocation2 + $0xa0] sm:$0xff]
    %v459 = vld [vmem:[#allocation2 + $0xa8] sm:$0xff]
    %v460 = vld [vmem:[#allocation2 + $0xb0] sm:$0xff]
    %v461 = vld [vmem:[#allocation2 + $0xb8] sm:$0xff]
    %v462 = vld [vmem:[#allocation2 + $0xc0] sm:$0xff]
    %v463 = vld [vmem:[#allocation2 + $0xc8] sm:$0xff]
    %v464 = vld [vmem:[#allocation2 + $0xd0] sm:$0xff]
    %v465 = vld [vmem:[#allocation2 + $0xd8] sm:$0xff]
    %v466 = vld [vmem:[#allocation2 + $0xe0] sm:$0xff]
    %v467 = vld [vmem:[#allocation2 + $0xe8] sm:$0xff]
    %v468 = vld [vmem:[#allocation2 + $0xf0] sm:$0xff]
    %v469 = vld [vmem:[#allocation2 + $0xf8] sm:$0xff]
    %v471 = vrot.slane %v419, 2
    %472 = vrot.lane.b32.xlu0 %v471, 64
    %v473 = vpop.permute.xlu0 %472
    %v475 = vrot.slane %v419, 4
    %v477 = vrot.slane %v419, 6
    %478 = vrot.lane.b32.xlu0 %v477, 64
    %v479 = vpop.permute.xlu0 %478
    %v481 = vsel %vm302, %v419, %v473
    %v482 = vsel %vm302, %v475, %v479
    %s483 = scalar_lea.vmem [#allocation2], 256
    %v484 = vld [vmem:[%s483] sm:$0xff]
    %v485 = vld [vmem:[%s483 + $0x8] sm:$0xff]
    %v486 = vld [vmem:[%s483 + $0x10] sm:$0xff]
    %v487 = vld [vmem:[%s483 + $0x18] sm:$0xff]
    %v488 = vld [vmem:[%s483 + $0x20] sm:$0xff]
    %v489 = vld [vmem:[%s483 + $0x28] sm:$0xff]
    %v490 = vld [vmem:[%s483 + $0x30] sm:$0xff]
    %v491 = vld [vmem:[%s483 + $0x38] sm:$0xff]
    %v492 = vld [vmem:[%s483 + $0x40] sm:$0xff]
    %v493 = vld [vmem:[%s483 + $0x48] sm:$0xff]
    %v494 = vld [vmem:[%s483 + $0x50] sm:$0xff]
    %v495 = vld [vmem:[%s483 + $0x58] sm:$0xff]
    %v496 = vld [vmem:[%s483 + $0x60] sm:$0xff]
    %v497 = vld [vmem:[%s483 + $0x68] sm:$0xff]
    %v498 = vld [vmem:[%s483 + $0x70] sm:$0xff]
    %v499 = vld [vmem:[%s483 + $0x78] sm:$0xff]
    %v500 = vld [vmem:[%s483 + $0x80] sm:$0xff]
    %v501 = vld [vmem:[%s483 + $0x88] sm:$0xff]
    %v502 = vld [vmem:[%s483 + $0x90] sm:$0xff]
    %v503 = vld [vmem:[%s483 + $0x98] sm:$0xff]
    %v504 = vld [vmem:[%s483 + $0xa0] sm:$0xff]
    %v505 = vld [vmem:[%s483 + $0xa8] sm:$0xff]
    %v506 = vld [vmem:[%s483 + $0xb0] sm:$0xff]
    %v507 = vld [vmem:[%s483 + $0xb8] sm:$0xff]
    %v508 = vld [vmem:[%s483 + $0xc0] sm:$0xff]
    %v509 = vld [vmem:[%s483 + $0xc8] sm:$0xff]
    %v510 = vld [vmem:[%s483 + $0xd0] sm:$0xff]
    %v511 = vld [vmem:[%s483 + $0xd8] sm:$0xff]
    %v512 = vld [vmem:[%s483 + $0xe0] sm:$0xff]
    %v513 = vld [vmem:[%s483 + $0xe8] sm:$0xff]
    %v514 = vld [vmem:[%s483 + $0xf0] sm:$0xff]
    %v515 = vld [vmem:[%s483 + $0xf8] sm:$0xff]
    %516 = vmatpush.msra.mxu0 %v499
    %517 = vmatpush.msra.mxu0 %v498
    %518 = vmatpush.msra.mxu0 %v497
    %519 = vmatpush.msra.mxu0 %v496
    %520 = vmatpush.msra.mxu0 %v495
    %521 = vmatpush.msra.mxu0 %v494
    %522 = vmatpush.msra.mxu0 %v493
    %523 = vmatpush.msra.mxu0 %v492
    %524 = vmatpush.msra.mxu0 %v491
    %525 = vmatpush.msra.mxu0 %v490
    %526 = vmatpush.msra.mxu0 %v489
    %527 = vmatpush.msra.mxu0 %v488
    %528 = vmatpush.msra.mxu0 %v487
    %529 = vmatpush.msra.mxu0 %v486
    %530 = vmatpush.msra.mxu0 %v485
    %531 = vmatpush.msra.mxu0 %v484
    %532 = vmatmul.f32.gmra.mxu0 %v481
    %v533 = vpop.f32.mrf.mxu0
    %v534 = vadd.f32 0.0, %v533
    %535 = vdwg.mxu0
    %536 = vmatpush.msra.mxu0 %v515
    %537 = vmatpush.msra.mxu0 %v514
    %538 = vmatpush.msra.mxu0 %v513
    %539 = vmatpush.msra.mxu0 %v512
    %540 = vmatpush.msra.mxu0 %v511
    %541 = vmatpush.msra.mxu0 %v510
    %542 = vmatpush.msra.mxu0 %v509
    %543 = vmatpush.msra.mxu0 %v508
    %544 = vmatpush.msra.mxu0 %v507
    %545 = vmatpush.msra.mxu0 %v506
    %546 = vmatpush.msra.mxu0 %v505
    %547 = vmatpush.msra.mxu0 %v504
    %548 = vmatpush.msra.mxu0 %v503
    %549 = vmatpush.msra.mxu0 %v502
    %550 = vmatpush.msra.mxu0 %v501
    %551 = vmatpush.msra.mxu0 %v500
    %552 = vmatmul.f32.gmra.mxu0 %v482
    %v553 = vpop.f32.mrf.mxu0
    %v554 = vadd.f32 %v534, %v553
    %555 = vdwg.mxu0
    %556 = vmatpush.msra.mxu0 %v453
    %557 = vmatpush.msra.mxu0 %v452
    %558 = vmatpush.msra.mxu0 %v451
    %559 = vmatpush.msra.mxu0 %v450
    %560 = vmatpush.msra.mxu0 %v449
    %561 = vmatpush.msra.mxu0 %v448
    %562 = vmatpush.msra.mxu0 %v447
    %563 = vmatpush.msra.mxu0 %v446
    %564 = vmatpush.msra.mxu0 %v445
    %565 = vmatpush.msra.mxu0 %v444
    %566 = vmatpush.msra.mxu0 %v443
    %567 = vmatpush.msra.mxu0 %v442
    %568 = vmatpush.msra.mxu0 %v441
    %569 = vmatpush.msra.mxu0 %v440
    %570 = vmatpush.msra.mxu0 %v439
    %571 = vmatpush.msra.mxu0 %v438
    %572 = vmatmul.f32.gmra.mxu0 %v436
    %v573 = vpop.f32.mrf.mxu0
    %v574 = vadd.f32 %v554, %v573
    %575 = vdwg.mxu0
    %576 = vmatpush.msra.mxu0 %v469
    %577 = vmatpush.msra.mxu0 %v468
    %578 = vmatpush.msra.mxu0 %v467
    %579 = vmatpush.msra.mxu0 %v466
    %580 = vmatpush.msra.mxu0 %v465
    %581 = vmatpush.msra.mxu0 %v464
    %582 = vmatpush.msra.mxu0 %v463
    %583 = vmatpush.msra.mxu0 %v462
    %584 = vmatpush.msra.mxu0 %v461
    %585 = vmatpush.msra.mxu0 %v460
    %586 = vmatpush.msra.mxu0 %v459
    %587 = vmatpush.msra.mxu0 %v458
    %588 = vmatpush.msra.mxu0 %v457
    %589 = vmatpush.msra.mxu0 %v456
    %590 = vmatpush.msra.mxu0 %v455
    %591 = vmatpush.msra.mxu0 %v454
    %592 = vmatmul.f32.gmra.mxu0 %v437
    %v593 = vpop.f32.mrf.mxu0
    %v594 = vadd.f32 %v574, %v593
    %595 = vdwg.mxu0
    %v597 = vrot.slane %v420, 2
    %598 = vrot.lane.b32.xlu0 %v597, 64
    %v599 = vpop.permute.xlu0 %598
    %v601 = vrot.slane %v420, 4
    %v603 = vrot.slane %v420, 6
    %604 = vrot.lane.b32.xlu0 %v603, 64
    %v605 = vpop.permute.xlu0 %604
    %v607 = vsel %vm302, %v420, %v599
    %v608 = vsel %vm302, %v601, %v605
    %s609 = scalar_lea.vmem [#allocation2], 512
    %v610 = vld [vmem:[%s609] sm:$0xff]
    %v611 = vld [vmem:[%s609 + $0x8] sm:$0xff]
    %v612 = vld [vmem:[%s609 + $0x10] sm:$0xff]
    %v613 = vld [vmem:[%s609 + $0x18] sm:$0xff]
    %v614 = vld [vmem:[%s609 + $0x20] sm:$0xff]
    %v615 = vld [vmem:[%s609 + $0x28] sm:$0xff]
    %v616 = vld [vmem:[%s609 + $0x30] sm:$0xff]
    %v617 = vld [vmem:[%s609 + $0x38] sm:$0xff]
    %v618 = vld [vmem:[%s609 + $0x40] sm:$0xff]
    %v619 = vld [vmem:[%s609 + $0x48] sm:$0xff]
    %v620 = vld [vmem:[%s609 + $0x50] sm:$0xff]
    %v621 = vld [vmem:[%s609 + $0x58] sm:$0xff]
    %v622 = vld [vmem:[%s609 + $0x60] sm:$0xff]
    %v623 = vld [vmem:[%s609 + $0x68] sm:$0xff]
    %v624 = vld [vmem:[%s609 + $0x70] sm:$0xff]
    %v625 = vld [vmem:[%s609 + $0x78] sm:$0xff]
    %v626 = vld [vmem:[%s609 + $0x80] sm:$0xff]
    %v627 = vld [vmem:[%s609 + $0x88] sm:$0xff]
    %v628 = vld [vmem:[%s609 + $0x90] sm:$0xff]
    %v629 = vld [vmem:[%s609 + $0x98] sm:$0xff]
    %v630 = vld [vmem:[%s609 + $0xa0] sm:$0xff]
    %v631 = vld [vmem:[%s609 + $0xa8] sm:$0xff]
    %v632 = vld [vmem:[%s609 + $0xb0] sm:$0xff]
    %v633 = vld [vmem:[%s609 + $0xb8] sm:$0xff]
    %v634 = vld [vmem:[%s609 + $0xc0] sm:$0xff]
    %v635 = vld [vmem:[%s609 + $0xc8] sm:$0xff]
    %v636 = vld [vmem:[%s609 + $0xd0] sm:$0xff]
    %v637 = vld [vmem:[%s609 + $0xd8] sm:$0xff]
    %v638 = vld [vmem:[%s609 + $0xe0] sm:$0xff]
    %v639 = vld [vmem:[%s609 + $0xe8] sm:$0xff]
    %v640 = vld [vmem:[%s609 + $0xf0] sm:$0xff]
    %v641 = vld [vmem:[%s609 + $0xf8] sm:$0xff]
    %642 = vmatpush.msra.mxu0 %v625
    %643 = vmatpush.msra.mxu0 %v624
    %644 = vmatpush.msra.mxu0 %v623
    %645 = vmatpush.msra.mxu0 %v622
    %646 = vmatpush.msra.mxu0 %v621
    %647 = vmatpush.msra.mxu0 %v620
    %648 = vmatpush.msra.mxu0 %v619
    %649 = vmatpush.msra.mxu0 %v618
    %650 = vmatpush.msra.mxu0 %v617
    %651 = vmatpush.msra.mxu0 %v616
    %652 = vmatpush.msra.mxu0 %v615
    %653 = vmatpush.msra.mxu0 %v614
    %654 = vmatpush.msra.mxu0 %v613
    %655 = vmatpush.msra.mxu0 %v612
    %656 = vmatpush.msra.mxu0 %v611
    %657 = vmatpush.msra.mxu0 %v610
    %658 = vmatmul.f32.gmra.mxu0 %v607
    %v659 = vpop.f32.mrf.mxu0
    %v660 = vadd.f32 0.0, %v659
    %661 = vdwg.mxu0
    %662 = vmatpush.msra.mxu0 %v641
    %663 = vmatpush.msra.mxu0 %v640
    %664 = vmatpush.msra.mxu0 %v639
    %665 = vmatpush.msra.mxu0 %v638
    %666 = vmatpush.msra.mxu0 %v637
    %667 = vmatpush.msra.mxu0 %v636
    %668 = vmatpush.msra.mxu0 %v635
    %669 = vmatpush.msra.mxu0 %v634
    %670 = vmatpush.msra.mxu0 %v633
    %671 = vmatpush.msra.mxu0 %v632
    %672 = vmatpush.msra.mxu0 %v631
    %673 = vmatpush.msra.mxu0 %v630
    %674 = vmatpush.msra.mxu0 %v629
    %675 = vmatpush.msra.mxu0 %v628
    %676 = vmatpush.msra.mxu0 %v627
    %677 = vmatpush.msra.mxu0 %v626
    %678 = vmatmul.f32.gmra.mxu0 %v608
    %v679 = vpop.f32.mrf.mxu0
    %v680 = vadd.f32 %v660, %v679
    %681 = vdwg.mxu0
    %v682 = vadd.f32 %v594, %v680
    %v684 = vrot.slane %v421, 2
    %685 = vrot.lane.b32.xlu0 %v684, 64
    %v686 = vpop.permute.xlu0 %685
    %v688 = vrot.slane %v421, 4
    %v690 = vrot.slane %v421, 6
    %691 = vrot.lane.b32.xlu0 %v690, 64
    %v692 = vpop.permute.xlu0 %691
    %v694 = vsel %vm302, %v421, %v686
    %v695 = vsel %vm302, %v688, %v692
    %s696 = scalar_lea.vmem [#allocation2], 768
    %v697 = vld [vmem:[%s696] sm:$0xff]
    %v698 = vld [vmem:[%s696 + $0x8] sm:$0xff]
    %v699 = vld [vmem:[%s696 + $0x10] sm:$0xff]
    %v700 = vld [vmem:[%s696 + $0x18] sm:$0xff]
    %v701 = vld [vmem:[%s696 + $0x20] sm:$0xff]
    %v702 = vld [vmem:[%s696 + $0x28] sm:$0xff]
    %v703 = vld [vmem:[%s696 + $0x30] sm:$0xff]
    %v704 = vld [vmem:[%s696 + $0x38] sm:$0xff]
    %v705 = vld [vmem:[%s696 + $0x40] sm:$0xff]
    %v706 = vld [vmem:[%s696 + $0x48] sm:$0xff]
    %v707 = vld [vmem:[%s696 + $0x50] sm:$0xff]
    %v708 = vld [vmem:[%s696 + $0x58] sm:$0xff]
    %v709 = vld [vmem:[%s696 + $0x60] sm:$0xff]
    %v710 = vld [vmem:[%s696 + $0x68] sm:$0xff]
    %v711 = vld [vmem:[%s696 + $0x70] sm:$0xff]
    %v712 = vld [vmem:[%s696 + $0x78] sm:$0xff]
    %v713 = vld [vmem:[%s696 + $0x80] sm:$0xff]
    %v714 = vld [vmem:[%s696 + $0x88] sm:$0xff]
    %v715 = vld [vmem:[%s696 + $0x90] sm:$0xff]
    %v716 = vld [vmem:[%s696 + $0x98] sm:$0xff]
    %v717 = vld [vmem:[%s696 + $0xa0] sm:$0xff]
    %v718 = vld [vmem:[%s696 + $0xa8] sm:$0xff]
    %v719 = vld [vmem:[%s696 + $0xb0] sm:$0xff]
    %v720 = vld [vmem:[%s696 + $0xb8] sm:$0xff]
    %v721 = vld [vmem:[%s696 + $0xc0] sm:$0xff]
    %v722 = vld [vmem:[%s696 + $0xc8] sm:$0xff]
    %v723 = vld [vmem:[%s696 + $0xd0] sm:$0xff]
    %v724 = vld [vmem:[%s696 + $0xd8] sm:$0xff]
    %v725 = vld [vmem:[%s696 + $0xe0] sm:$0xff]
    %v726 = vld [vmem:[%s696 + $0xe8] sm:$0xff]
    %v727 = vld [vmem:[%s696 + $0xf0] sm:$0xff]
    %v728 = vld [vmem:[%s696 + $0xf8] sm:$0xff]
    %729 = vmatpush.msra.mxu0 %v712
    %730 = vmatpush.msra.mxu0 %v711
    %731 = vmatpush.msra.mxu0 %v710
    %732 = vmatpush.msra.mxu0 %v709
    %733 = vmatpush.msra.mxu0 %v708
    %734 = vmatpush.msra.mxu0 %v707
    %735 = vmatpush.msra.mxu0 %v706
    %736 = vmatpush.msra.mxu0 %v705
    %737 = vmatpush.msra.mxu0 %v704
    %738 = vmatpush.msra.mxu0 %v703
    %739 = vmatpush.msra.mxu0 %v702
    %740 = vmatpush.msra.mxu0 %v701
    %741 = vmatpush.msra.mxu0 %v700
    %742 = vmatpush.msra.mxu0 %v699
    %743 = vmatpush.msra.mxu0 %v698
    %744 = vmatpush.msra.mxu0 %v697
    %745 = vmatmul.f32.gmra.mxu0 %v694
    %v746 = vpop.f32.mrf.mxu0
    %v747 = vadd.f32 0.0, %v746
    %748 = vdwg.mxu0
    %749 = vmatpush.msra.mxu0 %v728
    %750 = vmatpush.msra.mxu0 %v727
    %751 = vmatpush.msra.mxu0 %v726
    %752 = vmatpush.msra.mxu0 %v725
    %753 = vmatpush.msra.mxu0 %v724
    %754 = vmatpush.msra.mxu0 %v723
    %755 = vmatpush.msra.mxu0 %v722
    %756 = vmatpush.msra.mxu0 %v721
    %757 = vmatpush.msra.mxu0 %v720
    %758 = vmatpush.msra.mxu0 %v719
    %759 = vmatpush.msra.mxu0 %v718
    %760 = vmatpush.msra.mxu0 %v717
    %761 = vmatpush.msra.mxu0 %v716
    %762 = vmatpush.msra.mxu0 %v715
    %763 = vmatpush.msra.mxu0 %v714
    %764 = vmatpush.msra.mxu0 %v713
    %765 = vmatmul.f32.gmra.mxu0 %v695
    %v766 = vpop.f32.mrf.mxu0
    %v767 = vadd.f32 %v747, %v766
    %768 = vdwg.mxu0
    %v769 = vadd.f32 %v682, %v767
    %v771 = vrot.slane %v422, 2
    %772 = vrot.lane.b32.xlu0 %v771, 64
    %v773 = vpop.permute.xlu0 %772
    %v775 = vrot.slane %v422, 4
    %v777 = vrot.slane %v422, 6
    %778 = vrot.lane.b32.xlu0 %v777, 64
    %v779 = vpop.permute.xlu0 %778
    %v781 = vsel %vm302, %v422, %v773
    %v782 = vsel %vm302, %v775, %v779
    %s783 = scalar_lea.vmem [#allocation2], 1024
    %v784 = vld [vmem:[%s783] sm:$0xff]
    %v785 = vld [vmem:[%s783 + $0x8] sm:$0xff]
    %v786 = vld [vmem:[%s783 + $0x10] sm:$0xff]
    %v787 = vld [vmem:[%s783 + $0x18] sm:$0xff]
    %v788 = vld [vmem:[%s783 + $0x20] sm:$0xff]
    %v789 = vld [vmem:[%s783 + $0x28] sm:$0xff]
    %v790 = vld [vmem:[%s783 + $0x30] sm:$0xff]
    %v791 = vld [vmem:[%s783 + $0x38] sm:$0xff]
    %v792 = vld [vmem:[%s783 + $0x40] sm:$0xff]
    %v793 = vld [vmem:[%s783 + $0x48] sm:$0xff]
    %v794 = vld [vmem:[%s783 + $0x50] sm:$0xff]
    %v795 = vld [vmem:[%s783 + $0x58] sm:$0xff]
    %v796 = vld [vmem:[%s783 + $0x60] sm:$0xff]
    %v797 = vld [vmem:[%s783 + $0x68] sm:$0xff]
    %v798 = vld [vmem:[%s783 + $0x70] sm:$0xff]
    %v799 = vld [vmem:[%s783 + $0x78] sm:$0xff]
    %v800 = vld [vmem:[%s783 + $0x80] sm:$0xff]
    %v801 = vld [vmem:[%s783 + $0x88] sm:$0xff]
    %v802 = vld [vmem:[%s783 + $0x90] sm:$0xff]
    %v803 = vld [vmem:[%s783 + $0x98] sm:$0xff]
    %v804 = vld [vmem:[%s783 + $0xa0] sm:$0xff]
    %v805 = vld [vmem:[%s783 + $0xa8] sm:$0xff]
    %v806 = vld [vmem:[%s783 + $0xb0] sm:$0xff]
    %v807 = vld [vmem:[%s783 + $0xb8] sm:$0xff]
    %v808 = vld [vmem:[%s783 + $0xc0] sm:$0xff]
    %v809 = vld [vmem:[%s783 + $0xc8] sm:$0xff]
    %v810 = vld [vmem:[%s783 + $0xd0] sm:$0xff]
    %v811 = vld [vmem:[%s783 + $0xd8] sm:$0xff]
    %v812 = vld [vmem:[%s783 + $0xe0] sm:$0xff]
    %v813 = vld [vmem:[%s783 + $0xe8] sm:$0xff]
    %v814 = vld [vmem:[%s783 + $0xf0] sm:$0xff]
    %v815 = vld [vmem:[%s783 + $0xf8] sm:$0xff]
    %816 = vmatpush.msra.mxu0 %v799
    %817 = vmatpush.msra.mxu0 %v798
    %818 = vmatpush.msra.mxu0 %v797
    %819 = vmatpush.msra.mxu0 %v796
    %820 = vmatpush.msra.mxu0 %v795
    %821 = vmatpush.msra.mxu0 %v794
    %822 = vmatpush.msra.mxu0 %v793
    %823 = vmatpush.msra.mxu0 %v792
    %824 = vmatpush.msra.mxu0 %v791
    %825 = vmatpush.msra.mxu0 %v790
    %826 = vmatpush.msra.mxu0 %v789
    %827 = vmatpush.msra.mxu0 %v788
    %828 = vmatpush.msra.mxu0 %v787
    %829 = vmatpush.msra.mxu0 %v786
    %830 = vmatpush.msra.mxu0 %v785
    %831 = vmatpush.msra.mxu0 %v784
    %832 = vmatmul.f32.gmra.mxu0 %v781
    %v833 = vpop.f32.mrf.mxu0
    %v834 = vadd.f32 0.0, %v833
    %835 = vdwg.mxu0
    %836 = vmatpush.msra.mxu0 %v815
    %837 = vmatpush.msra.mxu0 %v814
    %838 = vmatpush.msra.mxu0 %v813
    %839 = vmatpush.msra.mxu0 %v812
    %840 = vmatpush.msra.mxu0 %v811
    %841 = vmatpush.msra.mxu0 %v810
    %842 = vmatpush.msra.mxu0 %v809
    %843 = vmatpush.msra.mxu0 %v808
    %844 = vmatpush.msra.mxu0 %v807
    %845 = vmatpush.msra.mxu0 %v806
    %846 = vmatpush.msra.mxu0 %v805
    %847 = vmatpush.msra.mxu0 %v804
    %848 = vmatpush.msra.mxu0 %v803
    %849 = vmatpush.msra.mxu0 %v802
    %850 = vmatpush.msra.mxu0 %v801
    %851 = vmatpush.msra.mxu0 %v800
    %852 = vmatmul.f32.gmra.mxu0 %v782
    %v853 = vpop.f32.mrf.mxu0
    %v854 = vadd.f32 %v834, %v853
    %855 = vdwg.mxu0
    %v856 = vadd.f32 %v769, %v854
    %v858 = vrot.slane %v423, 2
    %859 = vrot.lane.b32.xlu0 %v858, 64
    %v860 = vpop.permute.xlu0 %859
    %v862 = vrot.slane %v423, 4
    %v864 = vrot.slane %v423, 6
    %865 = vrot.lane.b32.xlu0 %v864, 64
    %v866 = vpop.permute.xlu0 %865
    %v868 = vsel %vm302, %v423, %v860
    %v869 = vsel %vm302, %v862, %v866
    %s870 = scalar_lea.vmem [#allocation2], 1280
    %v871 = vld [vmem:[%s870] sm:$0xff]
    %v872 = vld [vmem:[%s870 + $0x8] sm:$0xff]
    %v873 = vld [vmem:[%s870 + $0x10] sm:$0xff]
    %v874 = vld [vmem:[%s870 + $0x18] sm:$0xff]
    %v875 = vld [vmem:[%s870 + $0x20] sm:$0xff]
    %v876 = vld [vmem:[%s870 + $0x28] sm:$0xff]
    %v877 = vld [vmem:[%s870 + $0x30] sm:$0xff]
    %v878 = vld [vmem:[%s870 + $0x38] sm:$0xff]
    %v879 = vld [vmem:[%s870 + $0x40] sm:$0xff]
    %v880 = vld [vmem:[%s870 + $0x48] sm:$0xff]
    %v881 = vld [vmem:[%s870 + $0x50] sm:$0xff]
    %v882 = vld [vmem:[%s870 + $0x58] sm:$0xff]
    %v883 = vld [vmem:[%s870 + $0x60] sm:$0xff]
    %v884 = vld [vmem:[%s870 + $0x68] sm:$0xff]
    %v885 = vld [vmem:[%s870 + $0x70] sm:$0xff]
    %v886 = vld [vmem:[%s870 + $0x78] sm:$0xff]
    %v887 = vld [vmem:[%s870 + $0x80] sm:$0xff]
    %v888 = vld [vmem:[%s870 + $0x88] sm:$0xff]
    %v889 = vld [vmem:[%s870 + $0x90] sm:$0xff]
    %v890 = vld [vmem:[%s870 + $0x98] sm:$0xff]
    %v891 = vld [vmem:[%s870 + $0xa0] sm:$0xff]
    %v892 = vld [vmem:[%s870 + $0xa8] sm:$0xff]
    %v893 = vld [vmem:[%s870 + $0xb0] sm:$0xff]
    %v894 = vld [vmem:[%s870 + $0xb8] sm:$0xff]
    %v895 = vld [vmem:[%s870 + $0xc0] sm:$0xff]
    %v896 = vld [vmem:[%s870 + $0xc8] sm:$0xff]
    %v897 = vld [vmem:[%s870 + $0xd0] sm:$0xff]
    %v898 = vld [vmem:[%s870 + $0xd8] sm:$0xff]
    %v899 = vld [vmem:[%s870 + $0xe0] sm:$0xff]
    %v900 = vld [vmem:[%s870 + $0xe8] sm:$0xff]
    %v901 = vld [vmem:[%s870 + $0xf0] sm:$0xff]
    %v902 = vld [vmem:[%s870 + $0xf8] sm:$0xff]
    %903 = vmatpush.msra.mxu0 %v886
    %904 = vmatpush.msra.mxu0 %v885
    %905 = vmatpush.msra.mxu0 %v884
    %906 = vmatpush.msra.mxu0 %v883
    %907 = vmatpush.msra.mxu0 %v882
    %908 = vmatpush.msra.mxu0 %v881
    %909 = vmatpush.msra.mxu0 %v880
    %910 = vmatpush.msra.mxu0 %v879
    %911 = vmatpush.msra.mxu0 %v878
    %912 = vmatpush.msra.mxu0 %v877
    %913 = vmatpush.msra.mxu0 %v876
    %914 = vmatpush.msra.mxu0 %v875
    %915 = vmatpush.msra.mxu0 %v874
    %916 = vmatpush.msra.mxu0 %v873
    %917 = vmatpush.msra.mxu0 %v872
    %918 = vmatpush.msra.mxu0 %v871
    %919 = vmatmul.f32.gmra.mxu0 %v868
    %v920 = vpop.f32.mrf.mxu0
    %v921 = vadd.f32 0.0, %v920
    %922 = vdwg.mxu0
    %923 = vmatpush.msra.mxu0 %v902
    %924 = vmatpush.msra.mxu0 %v901
    %925 = vmatpush.msra.mxu0 %v900
    %926 = vmatpush.msra.mxu0 %v899
    %927 = vmatpush.msra.mxu0 %v898
    %928 = vmatpush.msra.mxu0 %v897
    %929 = vmatpush.msra.mxu0 %v896
    %930 = vmatpush.msra.mxu0 %v895
    %931 = vmatpush.msra.mxu0 %v894
    %932 = vmatpush.msra.mxu0 %v893
    %933 = vmatpush.msra.mxu0 %v892
    %934 = vmatpush.msra.mxu0 %v891
    %935 = vmatpush.msra.mxu0 %v890
    %936 = vmatpush.msra.mxu0 %v889
    %937 = vmatpush.msra.mxu0 %v888
    %938 = vmatpush.msra.mxu0 %v887
    %939 = vmatmul.f32.gmra.mxu0 %v869
    %v940 = vpop.f32.mrf.mxu0
    %v941 = vadd.f32 %v921, %v940
    %942 = vdwg.mxu0
    %v943 = vadd.f32 %v856, %v941
    %v945 = vrot.slane %v424, 6
    %946 = vrot.lane.b32.xlu0 %v945, 64
    %v947 = vpop.permute.xlu0 %946
    %v949 = vsel %vm302, %v862, %v947
    %s950 = scalar_lea.vmem [#allocation2], 1536
    %v951 = vld [vmem:[%s950] sm:$0xff]
    %v952 = vld [vmem:[%s950 + $0x8] sm:$0xff]
    %v953 = vld [vmem:[%s950 + $0x10] sm:$0xff]
    %v954 = vld [vmem:[%s950 + $0x18] sm:$0xff]
    %v955 = vld [vmem:[%s950 + $0x20] sm:$0xff]
    %v956 = vld [vmem:[%s950 + $0x28] sm:$0xff]
    %v957 = vld [vmem:[%s950 + $0x30] sm:$0xff]
    %v958 = vld [vmem:[%s950 + $0x38] sm:$0xff]
    %v959 = vld [vmem:[%s950 + $0x40] sm:$0xff]
    %v960 = vld [vmem:[%s950 + $0x48] sm:$0xff]
    %v961 = vld [vmem:[%s950 + $0x50] sm:$0xff]
    %v962 = vld [vmem:[%s950 + $0x58] sm:$0xff]
    %v963 = vld [vmem:[%s950 + $0x60] sm:$0xff]
    %v964 = vld [vmem:[%s950 + $0x68] sm:$0xff]
    %v965 = vld [vmem:[%s950 + $0x70] sm:$0xff]
    %v966 = vld [vmem:[%s950 + $0x78] sm:$0xff]
    %v967 = vld [vmem:[%s950 + $0x80] sm:$0xff]
    %v968 = vld [vmem:[%s950 + $0x88] sm:$0xff]
    %v969 = vld [vmem:[%s950 + $0x90] sm:$0xff]
    %v970 = vld [vmem:[%s950 + $0x98] sm:$0xff]
    %v971 = vld [vmem:[%s950 + $0xa0] sm:$0xff]
    %v972 = vld [vmem:[%s950 + $0xa8] sm:$0xff]
    %v973 = vld [vmem:[%s950 + $0xb0] sm:$0xff]
    %v974 = vld [vmem:[%s950 + $0xb8] sm:$0xff]
    %v975 = vld [vmem:[%s950 + $0xc0] sm:$0xff]
    %v976 = vld [vmem:[%s950 + $0xc8] sm:$0xff]
    %v977 = vld [vmem:[%s950 + $0xd0] sm:$0xff]
    %v978 = vld [vmem:[%s950 + $0xd8] sm:$0xff]
    %v979 = vld [vmem:[%s950 + $0xe0] sm:$0xff]
    %v980 = vld [vmem:[%s950 + $0xe8] sm:$0xff]
    %v981 = vld [vmem:[%s950 + $0xf0] sm:$0xff]
    %v982 = vld [vmem:[%s950 + $0xf8] sm:$0xff]
    %v985 = vrot.slane %v868, 2
    %v986 = vrot.slane %v949, 2
    %989 = vmatpush.msra.mxu0 %v966
    %990 = vmatpush.msra.mxu0 %v965
    %991 = vmatpush.msra.mxu0 %v964
    %992 = vmatpush.msra.mxu0 %v963
    %993 = vmatpush.msra.mxu0 %v962
    %994 = vmatpush.msra.mxu0 %v961
    %995 = vmatpush.msra.mxu0 %v960
    %996 = vmatpush.msra.mxu0 %v959
    %997 = vmatpush.msra.mxu0 %v958
    %998 = vmatpush.msra.mxu0 %v957
    %999 = vmatpush.msra.mxu0 %v956
    %1000 = vmatpush.msra.mxu0 %v955
    %1001 = vmatpush.msra.mxu0 %v954
    %1002 = vmatpush.msra.mxu0 %v953
    %1003 = vmatpush.msra.mxu0 %v952
    %1004 = vmatpush.msra.mxu0 %v951
    %1005 = vmatmul.f32.gmra.mxu0 %v985
    %v1006 = vpop.f32.mrf.mxu0
    %v1007 = vadd.f32 0.0, %v1006
    %1008 = vdwg.mxu0
    %1009 = vmatpush.msra.mxu0 %v982
    %1010 = vmatpush.msra.mxu0 %v981
    %1011 = vmatpush.msra.mxu0 %v980
    %1012 = vmatpush.msra.mxu0 %v979
    %1013 = vmatpush.msra.mxu0 %v978
    %1014 = vmatpush.msra.mxu0 %v977
    %1015 = vmatpush.msra.mxu0 %v976
    %1016 = vmatpush.msra.mxu0 %v975
    %1017 = vmatpush.msra.mxu0 %v974
    %1018 = vmatpush.msra.mxu0 %v973
    %1019 = vmatpush.msra.mxu0 %v972
    %1020 = vmatpush.msra.mxu0 %v971
    %1021 = vmatpush.msra.mxu0 %v970
    %1022 = vmatpush.msra.mxu0 %v969
    %1023 = vmatpush.msra.mxu0 %v968
    %1024 = vmatpush.msra.mxu0 %v967
    %1025 = vmatmul.f32.gmra.mxu0 %v986
    %v1026 = vpop.f32.mrf.mxu0
    %v1027 = vadd.f32 %v1007, %v1026
    %1028 = vdwg.mxu0
    %v1029 = vadd.f32 %v943, %v1027
    %v1030 = vld [vmem:[%s6] sm:$0x1]
    %v1032 = vperm.slane %v1030, 0
    %v1034 = vadd.f32 %v1029, %v1032
    %v1035 = vmax.f32 %v1034, 0.0
    %v1036 = vld [vmem:[%s7] sm:$0xff]
    %v1037 = vld [vmem:[%s7 + $0x8] sm:$0xff]
    %v1038 = vld [vmem:[%s7 + $0x10] sm:$0xff]
    %v1039 = vld [vmem:[%s7 + $0x18] sm:$0xff]
    %v1040 = vld [vmem:[%s7 + $0x20] sm:$0xff]
    %v1041 = vld [vmem:[%s7 + $0x28] sm:$0xff]
    %v1042 = vld [vmem:[%s7 + $0x30] sm:$0xff]
    %v1043 = vld [vmem:[%s7 + $0x38] sm:$0xff]
    %v1044 = vld [vmem:[%s7 + $0x40] sm:$0xff]
    %v1045 = vld [vmem:[%s7 + $0x48] sm:$0xff]
    %v1046 = vld [vmem:[%s7 + $0x50] sm:$0xff]
    %v1047 = vld [vmem:[%s7 + $0x58] sm:$0xff]
    %v1048 = vld [vmem:[%s7 + $0x60] sm:$0xff]
    %v1049 = vld [vmem:[%s7 + $0x68] sm:$0xff]
    %v1050 = vld [vmem:[%s7 + $0x70] sm:$0xff]
    %v1051 = vld [vmem:[%s7 + $0x78] sm:$0xff]
    %v1052 = vld [vmem:[%s8] sm:$0x1]
    %v1054 = vperm.slane %v1052, 0
    %1056 = vmatpush.msra.mxu0 %v1051
    %1057 = vmatpush.msra.mxu0 %v1050
    %1058 = vmatpush.msra.mxu0 %v1049
    %1059 = vmatpush.msra.mxu0 %v1048
    %1060 = vmatpush.msra.mxu0 %v1047
    %1061 = vmatpush.msra.mxu0 %v1046
    %1062 = vmatpush.msra.mxu0 %v1045
    %1063 = vmatpush.msra.mxu0 %v1044
    %1064 = vmatpush.msra.mxu0 %v1043
    %1065 = vmatpush.msra.mxu0 %v1042
    %1066 = vmatpush.msra.mxu0 %v1041
    %1067 = vmatpush.msra.mxu0 %v1040
    %1068 = vmatpush.msra.mxu0 %v1039
    %1069 = vmatpush.msra.mxu0 %v1038
    %1070 = vmatpush.msra.mxu0 %v1037
    %1071 = vmatpush.msra.mxu0 %v1036
    %1072 = vmatmul.f32.gmra.mxu0 %v1035
    %v1073 = vpop.f32.mrf.mxu0
    %v1074 = vadd.f32 %v1054, %v1073
    %1075 = vdwg.mxu0
    %1076 = vst [vmem:[#allocation5] sm:$0x3] %v1074
    // Predicated region
    $region42: #{convnet1d_forward.1} parent=1 // pred_check
      _
    $region43: #{convnet1d_forward.1} parent=1 // pred_check_branch
      %1078 = sbr.rel (0) target = $region45
    $region44: #{convnet1d_forward.1} parent=1 // pred_region
      %1080 = vsyncadd [#allocation4], 0
      %s1082 = sshll.u32 [#allocation5], 4
      %s1083 = int_to_ptr.vmem [resolvable:$true] %s1082
      %s1084 = sshll.u32 %s9, 4
      %s1085 = int_to_ptr.hbm [resolvable:$true] %s1084
      %1087 = dma.vmem_to_hbm [thread:$0]  %s1083, 32, %s1085, [#allocation4]
    $region45: #{convnet1d_forward.1} parent=1 // pred_fallthru
      _
    // Predicated region
    $region46: #{convnet1d_forward.1} parent=1 // pred_check
      _
    $region47: #{convnet1d_forward.1} parent=1 // pred_check_branch
      %1089 = sbr.rel (0) target = $region49
    $region48: #{convnet1d_forward.1} parent=1 // pred_region
      %1091 = dma.done [#allocation4], 32
    $region49: #{convnet1d_forward.1} parent=1 // pred_fallthru
      _
    %1092 = vsyncpa [#allocation3], 1
    %1093 = vsyncpa [#allocation4], 1

</llo_original>
